<compile_context>
chip_gen: v5e
topology: v5e:2x2
jax: 0.10.0
libtpu: 0.0.40
codegen_flags: <defaults>
</compile_context>

<pallas_src>
import jax
import jax.numpy as jnp
from jax import lax
from jax.experimental import pallas as pl
from jax.experimental.pallas import tpu as pltpu


def _pick_time_chunk(T, Bs, H, budget_bytes):
    """Largest divisor of T whose (TCk*Bs, 4H) f32 gx chunk fits the budget."""
    if T * Bs * 4 * H * 4 <= budget_bytes:
        return T
    best = 1
    for d in range(1, T):
        if T % d == 0 and d * Bs * 4 * H * 4 <= budget_bytes:
            best = d
    return best


def _make_lstm_kernel(nlayers, T, Bs, H, TCk, w_dtype):
    """Kernel body for a static (nlayers, T, Bs, H, TCk) config. Bs % 8 == 0."""
    n_chunks = T // TCk
    step_unroll = True if TCk <= 16 else 8
    chunk_unroll = True if n_chunks <= 2 else False
    narrow_gates = 4 * H <= 128  # whole 4H gate tile fits one vreg lane-wise

    def kernel(*refs):
        # refs (per batch shard): x (T*Bs, Fin), h0 (L, Bs, H), c0 (L, Bs, H),
        #   per layer l: w_ihT (Fin|H, 4H), w_hhT (H, 4H), bias (1, 4H),
        #   out (T*Bs, H)  [time-flipped],
        #   gx scratch (TCk*Bs, 4H) f32, [act scratch (T*Bs, H) iff nlayers>1]
        x_ref, h0_ref, c0_ref = refs[0], refs[1], refs[2]
        w_refs = refs[3:3 + 3 * nlayers]
        out_ref = refs[3 + 3 * nlayers]
        gx_ref = refs[3 + 3 * nlayers + 1]
        act_ref = refs[3 + 3 * nlayers + 2] if nlayers > 1 else None

        for layer in range(nlayers):
            w_ih_ref = w_refs[3 * layer]      # (Fin or H, 4H), w_dtype
            w_hh_ref = w_refs[3 * layer + 1]  # (H, 4H), w_dtype
            b_ref = w_refs[3 * layer + 2]     # (1, 4H) f32  (= b_ih + b_hh)
            last_layer = layer == nlayers - 1
            src_ref = x_ref if layer == 0 else act_ref

            def chunk_body(ck, carry, src_ref=src_ref, w_ih_ref=w_ih_ref,
                           w_hh_ref=w_hh_ref, b_ref=b_ref,
                           last_layer=last_layer):
                h_in, c_in = carry
                base = pl.multiple_of(ck * (TCk * Bs), TCk * Bs)
                # Recurrence-free projection for the whole chunk (one big MXU
                # call, bias folded in).  Reads chunk rows of src BEFORE the
                # time loop overwrites them -> in-place act buffer is safe.
                gx_ref[...] = (
                    jnp.dot(src_ref[pl.ds(base, TCk * Bs), :], w_ih_ref[...],
                            preferred_element_type=jnp.float32)
                    + b_ref[...])

                def step(t, hc):
                    h, c = hc
                    row = pl.multiple_of(t * Bs, Bs)
                    gates = gx_ref[pl.ds(row, Bs), :] + jnp.dot(
                        h.astype(w_dtype), w_hh_ref[...],
                        preferred_element_type=jnp.float32)    # (Bs, 4H) f32
                    # PyTorch gate order i, f, g, o.
                    if narrow_gates:
                        # 4H <= 128: one vreg; whole-tile EUP is optimal.
                        sig = jax.nn.sigmoid(gates)
                        tnh = jnp.tanh(gates)
                        i_g, f_g = sig[:, 0:H], sig[:, H:2 * H]
                        g_g, o_g = tnh[:, 2 * H:3 * H], sig[:, 3 * H:4 * H]
                    else:
                        # Only the slices that need each transcendental
                        # (~5H instead of ~9H EUP elements per row).
                        if_s = jax.nn.sigmoid(gates[:, 0:2 * H])
                        i_g, f_g = if_s[:, 0:H], if_s[:, H:2 * H]
                        g_g = jnp.tanh(gates[:, 2 * H:3 * H])
                        o_g = jax.nn.sigmoid(gates[:, 3 * H:4 * H])
                    c_new = f_g * c + i_g * g_g
                    h_new = o_g * jnp.tanh(c_new)
                    gt = ck * TCk + t
                    if last_layer:
                        # torch.flip(output, [1]) fused into the store.
                        out_row = pl.multiple_of((T - 1 - gt) * Bs, Bs)
                        out_ref[pl.ds(out_row, Bs), :] = h_new
                    else:
                        act_row = pl.multiple_of(gt * Bs, Bs)
                        act_ref[pl.ds(act_row, Bs), :] = h_new.astype(w_dtype)
                    return h_new, c_new

                return lax.fori_loop(0, TCk, step, (h_in, c_in),
                                     unroll=step_unroll)

            lax.fori_loop(0, n_chunks, chunk_body,
                          (h0_ref[layer], c0_ref[layer]),
                          unroll=chunk_unroll)

    return kernel


def decoder_rnn_forward(x, h0, c0, params, *, weight_dtype=jnp.bfloat16):
    """DecoderRNN.forward: multi-layer LSTM (batch_first) + flip along time.

    x: (B, T, Fin); h0, c0: (nlayers, B, H); params: per-layer
    (w_ih, w_hh, b_ih, b_hh) in PyTorch layout.
    weight_dtype=bfloat16 (default) runs all MXU operands (weights, inputs,
    inter-layer activations) in bf16; gate/cell math stays f32.
    """
    B, T, Fin = x.shape
    nlayers, _, H = h0.shape
    w_dtype = jnp.dtype(weight_dtype)

    # TODO(synk): per-step cost is latency-dominated; batching more independent
    # sequences (up to 128/256 MXU rows) is nearly free throughput.
    num_shards = 2 if B > 8 else 1          # one batch shard per v7x TensorCore
    Bp = -(-B // (8 * num_shards)) * (8 * num_shards)
    Bs = Bp // num_shards

    TCk = _pick_time_chunk(T, Bs, H, 8 << 20)   # cap gx chunk at ~8 MiB

    # Time-major, batch-padded, sharded, flattened to 2-D slabs per shard.
    x_tm = jnp.transpose(x, (1, 0, 2)).astype(jnp.float32)       # (T, B, Fin)
    x_tm = jnp.pad(x_tm, ((0, 0), (0, Bp - B), (0, 0)))
    x_sh = (x_tm.reshape(T, num_shards, Bs, Fin)
                .transpose(1, 0, 2, 3)
                .reshape(num_shards, T * Bs, Fin)
                .astype(w_dtype))

    def _shard_state(s):
        sp = jnp.pad(s.astype(jnp.float32), ((0, 0), (0, Bp - B), (0, 0)))
        return sp.reshape(nlayers, num_shards, Bs, H).transpose(1, 0, 2, 3)

    h0_sh = _shard_state(h0)                                     # (S, L, Bs, H)
    c0_sh = _shard_state(c0)

    flat_weights, w_specs = [], []
    for (w_ih, w_hh, b_ih, b_hh) in params:
        fin_l = w_ih.shape[1]
        flat_weights += [
            jnp.transpose(w_ih).astype(w_dtype),                 # (Fin|H, 4H)
            jnp.transpose(w_hh).astype(w_dtype),                 # (H, 4H)
            (b_ih + b_hh).reshape(1, -1).astype(jnp.float32),    # (1, 4H)
        ]
        w_specs += [
            pl.BlockSpec((fin_l, 4 * H), lambda s: (0, 0)),
            pl.BlockSpec((H, 4 * H), lambda s: (0, 0)),
            pl.BlockSpec((1, 4 * H), lambda s: (0, 0)),
        ]

    in_specs = [
        pl.BlockSpec((None, T * Bs, Fin), lambda s: (s, 0, 0)),
        pl.BlockSpec((None, nlayers, Bs, H), lambda s: (s, 0, 0, 0)),
        pl.BlockSpec((None, nlayers, Bs, H), lambda s: (s, 0, 0, 0)),
    ] + w_specs
    out_spec = pl.BlockSpec((None, T * Bs, H), lambda s: (s, 0, 0))

    scratch_shapes = [pltpu.VMEM((TCk * Bs, 4 * H), jnp.float32)]
    if nlayers > 1:
        scratch_shapes.append(pltpu.VMEM((T * Bs, H), w_dtype))

    # Generation-aware VMEM budget: what one program touches (double-buffered
    # blocked operands) + scratch + headroom, clamped to ~85% of this chip's
    # physical VMEM (128 MiB v5e/v6e, 64 MiB v7x).
    def _nbytes(a):
        return a.size * a.dtype.itemsize

    itemsz_w = w_dtype.itemsize
    per_prog = (T * Bs * Fin * itemsz_w                 # x shard
                + 2 * nlayers * Bs * H * 4              # h0 + c0 shard
                + sum(_nbytes(w) for w in flat_weights)
                + T * Bs * H * 4)                       # out shard
    scratch_bytes = (TCk * Bs * 4 * H * 4
                     + (T * Bs * H * itemsz_w if nlayers > 1 else 0))
    try:
        info = pltpu.get_tpu_info()
        cap = int(getattr(info, "vmem_capacity_bytes", 128 << 20) * 0.85)
    except Exception:  # pragma: no cover - conservative fallback
        cap = 64 << 20
    vmem_limit = int(min(max(2 * per_prog + scratch_bytes + (8 << 20),
                             32 << 20), cap))

    kernel = _make_lstm_kernel(nlayers, T, Bs, H, TCk, w_dtype)

    out_sh = pl.pallas_call(
        kernel,
        out_shape=jax.ShapeDtypeStruct((num_shards, T * Bs, H), jnp.float32),
        grid=(num_shards,),
        in_specs=in_specs,
        out_specs=out_spec,
        scratch_shapes=scratch_shapes,
        compiler_params=pltpu.CompilerParams(
            dimension_semantics=("parallel",),
            vmem_limit_bytes=vmem_limit),
    )(x_sh, h0_sh, c0_sh, *flat_weights)

    out_tm = (out_sh.reshape(num_shards, T, Bs, H)
                    .transpose(1, 0, 2, 3)
                    .reshape(T, Bp, H)[:, :B, :])                # (T, B, H)
    return jnp.transpose(out_tm, (1, 0, 2))                      # (B, T, H)


def _lstm_reference(x, h0, c0, params):
    """Pure-JAX reference with identical PyTorch LSTM semantics (eval mode)."""
    B, T, _ = x.shape
    H = h0.shape[2]
    inp = x
    for l, (w_ih, w_hh, b_ih, b_hh) in enumerate(params):
        h, c = h0[l], c0[l]
        outs = []
        for t in range(T):
            g = inp[:, t, :] @ w_ih.T + h @ w_hh.T + b_ih + b_hh
            i = jax.nn.sigmoid(g[:, :H])
            f = jax.nn.sigmoid(g[:, H:2 * H])
            gg = jnp.tanh(g[:, 2 * H:3 * H])
            o = jax.nn.sigmoid(g[:, 3 * H:])
            c = f * c + i * gg
            h = o * jnp.tanh(c)
            outs.append(h)
        inp = jnp.stack(outs, axis=1)
    return inp[:, ::-1, :]


def init_decoder_rnn_params(key, input_size, nhidden, nlayers):
    """Deterministic uniform(-0.1, 0.1) init, matching DecoderRNN.init_weights."""
    params = []
    for l in range(nlayers):
        fin = input_size if l == 0 else nhidden
        key, k1, k2, k3, k4 = jax.random.split(key, 5)
        w_ih = jax.random.uniform(k1, (4 * nhidden, fin), jnp.float32, -0.1, 0.1)
        w_hh = jax.random.uniform(k2, (4 * nhidden, nhidden), jnp.float32, -0.1, 0.1)
        b_ih = jax.random.uniform(k3, (4 * nhidden,), jnp.float32, -0.1, 0.1)
        b_hh = jax.random.uniform(k4, (4 * nhidden,), jnp.float32, -0.1, 0.1)
        params.append((w_ih, w_hh, b_ih, b_hh))
    return params


if __name__ == "__main__":
    input_size = 16
    nhidden = 32
    nlayers = 2
    B, T = 2, 8

    key = jax.random.PRNGKey(0)
    key, kx, kh, kc, kp = jax.random.split(key, 5)

    x = jax.random.normal(kx, (B, T, input_size), jnp.float32)
    h0 = jax.random.normal(kh, (nlayers, B, nhidden), jnp.float32)
    c0 = jax.random.normal(kc, (nlayers, B, nhidden), jnp.float32)
    params = init_decoder_rnn_params(kp, input_size, nhidden, nlayers)

    ref = _lstm_reference(x, h0, c0, params)

    # f32 path: tight check against the pure-JAX PyTorch-semantics reference.
    out_f32 = jax.block_until_ready(
        decoder_rnn_forward(x, h0, c0, params, weight_dtype=jnp.float32))
    assert out_f32.shape == (B, T, nhidden)
    assert jnp.allclose(out_f32, ref, atol=1e-4, rtol=1e-4), "f32 mismatch vs ref"

    # bf16 default fast path (weights + activations): looser tolerance.
    out_bf16 = jax.block_until_ready(
        decoder_rnn_forward(x, h0, c0, params, weight_dtype=jnp.bfloat16))
    assert out_bf16.shape == (B, T, nhidden)
    assert jnp.allclose(out_bf16, ref, atol=5e-2, rtol=0.0), "bf16 mismatch vs ref"

    print("KERNEL_OK")
</pallas_src>

<mosaic_0001>
module attributes {stable_mosaic.version = 11 : i64} {
  func.func @kernel(%arg0: i32, %arg1: memref<1x64x16xf32, #tpu.memory_space<vmem>>, %arg2: memref<1x2x8x32xf32, #tpu.memory_space<vmem>>, %arg3: memref<1x2x8x32xf32, #tpu.memory_space<vmem>>, %arg4: memref<16x128xf32, #tpu.memory_space<vmem>>, %arg5: memref<32x128xf32, #tpu.memory_space<vmem>>, %arg6: memref<1x128xf32, #tpu.memory_space<vmem>>, %arg7: memref<32x128xf32, #tpu.memory_space<vmem>>, %arg8: memref<32x128xf32, #tpu.memory_space<vmem>>, %arg9: memref<1x128xf32, #tpu.memory_space<vmem>>, %arg10: memref<1x64x32xf32, #tpu.memory_space<vmem>>, %arg11: memref<64x128xf32, #tpu.memory_space<vmem>>, %arg12: memref<64x32xf32, #tpu.memory_space<vmem>>) attributes {dimension_semantics = [#tpu.dimension_semantics<parallel>], iteration_bounds = array<i64: 1>, scalar_prefetch = 0 : i64, scratch_operands = 2 : i64, tpu.core_type = #tpu.core_type<tc>, window_params = [{transform_indices = @transform_0, window_bounds = array<i64: 1, 64, 16>}, {transform_indices = @transform_1, window_bounds = array<i64: 1, 2, 8, 32>}, {transform_indices = @transform_2, window_bounds = array<i64: 1, 2, 8, 32>}, {pipeline_mode = #tpu.pipeline_mode<synchronous>, transform_indices = @transform_3, window_bounds = array<i64: 16, 128>}, {pipeline_mode = #tpu.pipeline_mode<synchronous>, transform_indices = @transform_4, window_bounds = array<i64: 32, 128>}, {pipeline_mode = #tpu.pipeline_mode<synchronous>, transform_indices = @transform_5, window_bounds = array<i64: 1, 128>}, {pipeline_mode = #tpu.pipeline_mode<synchronous>, transform_indices = @transform_6, window_bounds = array<i64: 32, 128>}, {pipeline_mode = #tpu.pipeline_mode<synchronous>, transform_indices = @transform_7, window_bounds = array<i64: 32, 128>}, {pipeline_mode = #tpu.pipeline_mode<synchronous>, transform_indices = @transform_8, window_bounds = array<i64: 1, 128>}, {transform_indices = @transform_9, window_bounds = array<i64: 1, 64, 32>}]} {
    %c0 = arith.constant 0 : index
    %c0_0 = arith.constant 0 : index
    %c0_1 = arith.constant 0 : index
    %c0_2 = arith.constant 0 : index
    %0 = vector.load %arg2[%c0, %c0_0, %c0_1, %c0_2] : memref<1x2x8x32xf32, #tpu.memory_space<vmem>>, vector<1x1x8x32xf32>
    %1 = vector.shape_cast %0 : vector<1x1x8x32xf32> to vector<8x32xf32>
    %c0_3 = arith.constant 0 : index
    %c0_4 = arith.constant 0 : index
    %c0_5 = arith.constant 0 : index
    %c0_6 = arith.constant 0 : index
    %2 = vector.load %arg3[%c0_3, %c0_4, %c0_5, %c0_6] : memref<1x2x8x32xf32, #tpu.memory_space<vmem>>, vector<1x1x8x32xf32>
    %3 = vector.shape_cast %2 : vector<1x1x8x32xf32> to vector<8x32xf32>
    %c0_i32 = arith.constant 0 : i32
    %c64_i32 = arith.constant 64 : i32
    %4 = arith.muli %c0_i32, %c64_i32 : i32
    %5 = tpu.assume_multiple %4, 64 : i32
    %c0_7 = arith.constant 0 : index
    %6 = arith.index_cast %5 : i32 to index
    %c0_8 = arith.constant 0 : index
    %7 = vector.load %arg1[%c0_7, %6, %c0_8] : memref<1x64x16xf32, #tpu.memory_space<vmem>>, vector<1x64x16xf32>
    %8 = vector.shape_cast %7 : vector<1x64x16xf32> to vector<64x16xf32>
    %c0_9 = arith.constant 0 : index
    %c0_10 = arith.constant 0 : index
    %9 = vector.load %arg4[%c0_9, %c0_10] : memref<16x128xf32, #tpu.memory_space<vmem>>, vector<16x128xf32>
    %cst = arith.constant dense<0.000000e+00> : vector<64x128xf32>
    %10 = tpu.matmul %8, %9, %cst {dimension_numbers = #tpu.dot_dimension_numbers<[1], [0], [0], [1], [0, 0, 1, 1], [], []>} : vector<64x16xf32>, vector<16x128xf32>, vector<64x128xf32> -> vector<64x128xf32>
    %c0_11 = arith.constant 0 : index
    %c0_12 = arith.constant 0 : index
    %11 = vector.load %arg6[%c0_11, %c0_12] : memref<1x128xf32, #tpu.memory_space<vmem>>, vector<1x128xf32>
    %12 = vector.broadcast %11 : vector<1x128xf32> to vector<64x128xf32>
    %13 = arith.addf %10, %12 : vector<64x128xf32>
    %c0_13 = arith.constant 0 : index
    %c0_14 = arith.constant 0 : index
    %14 = vector.load %arg11[%c0_13, %c0_14] : memref<64x128xf32, #tpu.memory_space<vmem>>, vector<64x128xf32>
    tpu.vector_store %arg11[%c0_13, %c0_14], %13 {strides = array<i32>} : memref<64x128xf32, #tpu.memory_space<vmem>>, vector<64x128xf32>,
    %c0_i32_15 = arith.constant 0 : i32
    %c8_i32 = arith.constant 8 : i32
    %15 = arith.muli %c0_i32_15, %c8_i32 : i32
    %16 = tpu.assume_multiple %15, 8 : i32
    %17 = arith.index_cast %16 : i32 to index
    %c0_16 = arith.constant 0 : index
    %18 = vector.load %arg11[%17, %c0_16] : memref<64x128xf32, #tpu.memory_space<vmem>>, vector<8x128xf32>
    %c0_17 = arith.constant 0 : index
    %c0_18 = arith.constant 0 : index
    %19 = vector.load %arg5[%c0_17, %c0_18] : memref<32x128xf32, #tpu.memory_space<vmem>>, vector<32x128xf32>
    %cst_19 = arith.constant dense<0.000000e+00> : vector<8x128xf32>
    %20 = tpu.matmul %1, %19, %cst_19 {dimension_numbers = #tpu.dot_dimension_numbers<[1], [0], [0], [1], [0, 0, 1, 1], [], []>} : vector<8x32xf32>, vector<32x128xf32>, vector<8x128xf32> -> vector<8x128xf32>
    %21 = arith.addf %18, %20 : vector<8x128xf32>
    %22 = arith.negf %21 : vector<8x128xf32>
    %23 = math.exp %22 : vector<8x128xf32>
    %cst_20 = arith.constant 1.000000e+00 : f32
    %24 = vector.broadcast %cst_20 : f32 to vector<8x128xf32>
    %25 = arith.addf %24, %23 : vector<8x128xf32>
    %26 = arith.divf %24, %25 : vector<8x128xf32>
    %27 = math.tanh %21 : vector<8x128xf32>
    %28 = vector.extract_strided_slice %26 {offsets = [0, 0], sizes = [8, 32], strides = [1, 1]} : vector<8x128xf32> to vector<8x32xf32>
    %29 = vector.extract_strided_slice %26 {offsets = [0, 32], sizes = [8, 32], strides = [1, 1]} : vector<8x128xf32> to vector<8x32xf32>
    %30 = vector.extract_strided_slice %27 {offsets = [0, 64], sizes = [8, 32], strides = [1, 1]} : vector<8x128xf32> to vector<8x32xf32>
    %31 = vector.extract_strided_slice %26 {offsets = [0, 96], sizes = [8, 32], strides = [1, 1]} : vector<8x128xf32> to vector<8x32xf32>
    %32 = arith.mulf %29, %3 : vector<8x32xf32>
    %33 = arith.mulf %28, %30 : vector<8x32xf32>
    %34 = arith.addf %32, %33 : vector<8x32xf32>
    %35 = math.tanh %34 : vector<8x32xf32>
    %36 = arith.mulf %31, %35 : vector<8x32xf32>
    %c8_i32_21 = arith.constant 8 : i32
    %37 = arith.muli %c0_i32, %c8_i32_21 : i32
    %38 = arith.addi %37, %c0_i32_15 : i32
    %c8_i32_22 = arith.constant 8 : i32
    %39 = arith.muli %38, %c8_i32_22 : i32
    %40 = tpu.assume_multiple %39, 8 : i32
    %41 = arith.index_cast %40 : i32 to index
    %c0_23 = arith.constant 0 : index
    %42 = vector.load %arg12[%41, %c0_23] : memref<64x32xf32, #tpu.memory_space<vmem>>, vector<8x32xf32>
    tpu.vector_store %arg12[%41, %c0_23], %36 {strides = array<i32>} : memref<64x32xf32, #tpu.memory_space<vmem>>, vector<8x32xf32>,
    %c1_i32 = arith.constant 1 : i32
    %c8_i32_24 = arith.constant 8 : i32
    %43 = arith.muli %c1_i32, %c8_i32_24 : i32
    %44 = tpu.assume_multiple %43, 8 : i32
    %45 = arith.index_cast %44 : i32 to index
    %c0_25 = arith.constant 0 : index
    %46 = vector.load %arg11[%45, %c0_25] : memref<64x128xf32, #tpu.memory_space<vmem>>, vector<8x128xf32>
    %c0_26 = arith.constant 0 : index
    %c0_27 = arith.constant 0 : index
    %47 = vector.load %arg5[%c0_26, %c0_27] : memref<32x128xf32, #tpu.memory_space<vmem>>, vector<32x128xf32>
    %cst_28 = arith.constant dense<0.000000e+00> : vector<8x128xf32>
    %48 = tpu.matmul %36, %47, %cst_28 {dimension_numbers = #tpu.dot_dimension_numbers<[1], [0], [0], [1], [0, 0, 1, 1], [], []>} : vector<8x32xf32>, vector<32x128xf32>, vector<8x128xf32> -> vector<8x128xf32>
    %49 = arith.addf %46, %48 : vector<8x128xf32>
    %50 = arith.negf %49 : vector<8x128xf32>
    %51 = math.exp %50 : vector<8x128xf32>
    %cst_29 = arith.constant 1.000000e+00 : f32
    %52 = vector.broadcast %cst_29 : f32 to vector<8x128xf32>
    %53 = arith.addf %52, %51 : vector<8x128xf32>
    %54 = arith.divf %52, %53 : vector<8x128xf32>
    %55 = math.tanh %49 : vector<8x128xf32>
    %56 = vector.extract_strided_slice %54 {offsets = [0, 0], sizes = [8, 32], strides = [1, 1]} : vector<8x128xf32> to vector<8x32xf32>
    %57 = vector.extract_strided_slice %54 {offsets = [0, 32], sizes = [8, 32], strides = [1, 1]} : vector<8x128xf32> to vector<8x32xf32>
    %58 = vector.extract_strided_slice %55 {offsets = [0, 64], sizes = [8, 32], strides = [1, 1]} : vector<8x128xf32> to vector<8x32xf32>
    %59 = vector.extract_strided_slice %54 {offsets = [0, 96], sizes = [8, 32], strides = [1, 1]} : vector<8x128xf32> to vector<8x32xf32>
    %60 = arith.mulf %57, %34 : vector<8x32xf32>
    %61 = arith.mulf %56, %58 : vector<8x32xf32>
    %62 = arith.addf %60, %61 : vector<8x32xf32>
    %63 = math.tanh %62 : vector<8x32xf32>
    %64 = arith.mulf %59, %63 : vector<8x32xf32>
    %c8_i32_30 = arith.constant 8 : i32
    %65 = arith.muli %c0_i32, %c8_i32_30 : i32
    %66 = arith.addi %65, %c1_i32 : i32
    %c8_i32_31 = arith.constant 8 : i32
    %67 = arith.muli %66, %c8_i32_31 : i32
    %68 = tpu.assume_multiple %67, 8 : i32
    %69 = arith.index_cast %68 : i32 to index
    %c0_32 = arith.constant 0 : index
    %70 = vector.load %arg12[%69, %c0_32] : memref<64x32xf32, #tpu.memory_space<vmem>>, vector<8x32xf32>
    tpu.vector_store %arg12[%69, %c0_32], %64 {strides = array<i32>} : memref<64x32xf32, #tpu.memory_space<vmem>>, vector<8x32xf32>,
    %c2_i32 = arith.constant 2 : i32
    %c8_i32_33 = arith.constant 8 : i32
    %71 = arith.muli %c2_i32, %c8_i32_33 : i32
    %72 = tpu.assume_multiple %71, 8 : i32
    %73 = arith.index_cast %72 : i32 to index
    %c0_34 = arith.constant 0 : index
    %74 = vector.load %arg11[%73, %c0_34] : memref<64x128xf32, #tpu.memory_space<vmem>>, vector<8x128xf32>
    %c0_35 = arith.constant 0 : index
    %c0_36 = arith.constant 0 : index
    %75 = vector.load %arg5[%c0_35, %c0_36] : memref<32x128xf32, #tpu.memory_space<vmem>>, vector<32x128xf32>
    %cst_37 = arith.constant dense<0.000000e+00> : vector<8x128xf32>
    %76 = tpu.matmul %64, %75, %cst_37 {dimension_numbers = #tpu.dot_dimension_numbers<[1], [0], [0], [1], [0, 0, 1, 1], [], []>} : vector<8x32xf32>, vector<32x128xf32>, vector<8x128xf32> -> vector<8x128xf32>
    %77 = arith.addf %74, %76 : vector<8x128xf32>
    %78 = arith.negf %77 : vector<8x128xf32>
    %79 = math.exp %78 : vector<8x128xf32>
    %cst_38 = arith.constant 1.000000e+00 : f32
    %80 = vector.broadcast %cst_38 : f32 to vector<8x128xf32>
    %81 = arith.addf %80, %79 : vector<8x128xf32>
    %82 = arith.divf %80, %81 : vector<8x128xf32>
    %83 = math.tanh %77 : vector<8x128xf32>
    %84 = vector.extract_strided_slice %82 {offsets = [0, 0], sizes = [8, 32], strides = [1, 1]} : vector<8x128xf32> to vector<8x32xf32>
    %85 = vector.extract_strided_slice %82 {offsets = [0, 32], sizes = [8, 32], strides = [1, 1]} : vector<8x128xf32> to vector<8x32xf32>
    %86 = vector.extract_strided_slice %83 {offsets = [0, 64], sizes = [8, 32], strides = [1, 1]} : vector<8x128xf32> to vector<8x32xf32>
    %87 = vector.extract_strided_slice %82 {offsets = [0, 96], sizes = [8, 32], strides = [1, 1]} : vector<8x128xf32> to vector<8x32xf32>
    %88 = arith.mulf %85, %62 : vector<8x32xf32>
    %89 = arith.mulf %84, %86 : vector<8x32xf32>
    %90 = arith.addf %88, %89 : vector<8x32xf32>
    %91 = math.tanh %90 : vector<8x32xf32>
    %92 = arith.mulf %87, %91 : vector<8x32xf32>
    %c8_i32_39 = arith.constant 8 : i32
    %93 = arith.muli %c0_i32, %c8_i32_39 : i32
    %94 = arith.addi %93, %c2_i32 : i32
    %c8_i32_40 = arith.constant 8 : i32
    %95 = arith.muli %94, %c8_i32_40 : i32
    %96 = tpu.assume_multiple %95, 8 : i32
    %97 = arith.index_cast %96 : i32 to index
    %c0_41 = arith.constant 0 : index
    %98 = vector.load %arg12[%97, %c0_41] : memref<64x32xf32, #tpu.memory_space<vmem>>, vector<8x32xf32>
    tpu.vector_store %arg12[%97, %c0_41], %92 {strides = array<i32>} : memref<64x32xf32, #tpu.memory_space<vmem>>, vector<8x32xf32>,
    %c3_i32 = arith.constant 3 : i32
    %c8_i32_42 = arith.constant 8 : i32
    %99 = arith.muli %c3_i32, %c8_i32_42 : i32
    %100 = tpu.assume_multiple %99, 8 : i32
    %101 = arith.index_cast %100 : i32 to index
    %c0_43 = arith.constant 0 : index
    %102 = vector.load %arg11[%101, %c0_43] : memref<64x128xf32, #tpu.memory_space<vmem>>, vector<8x128xf32>
    %c0_44 = arith.constant 0 : index
    %c0_45 = arith.constant 0 : index
    %103 = vector.load %arg5[%c0_44, %c0_45] : memref<32x128xf32, #tpu.memory_space<vmem>>, vector<32x128xf32>
    %cst_46 = arith.constant dense<0.000000e+00> : vector<8x128xf32>
    %104 = tpu.matmul %92, %103, %cst_46 {dimension_numbers = #tpu.dot_dimension_numbers<[1], [0], [0], [1], [0, 0, 1, 1], [], []>} : vector<8x32xf32>, vector<32x128xf32>, vector<8x128xf32> -> vector<8x128xf32>
    %105 = arith.addf %102, %104 : vector<8x128xf32>
    %106 = arith.negf %105 : vector<8x128xf32>
    %107 = math.exp %106 : vector<8x128xf32>
    %cst_47 = arith.constant 1.000000e+00 : f32
    %108 = vector.broadcast %cst_47 : f32 to vector<8x128xf32>
    %109 = arith.addf %108, %107 : vector<8x128xf32>
    %110 = arith.divf %108, %109 : vector<8x128xf32>
    %111 = math.tanh %105 : vector<8x128xf32>
    %112 = vector.extract_strided_slice %110 {offsets = [0, 0], sizes = [8, 32], strides = [1, 1]} : vector<8x128xf32> to vector<8x32xf32>
    %113 = vector.extract_strided_slice %110 {offsets = [0, 32], sizes = [8, 32], strides = [1, 1]} : vector<8x128xf32> to vector<8x32xf32>
    %114 = vector.extract_strided_slice %111 {offsets = [0, 64], sizes = [8, 32], strides = [1, 1]} : vector<8x128xf32> to vector<8x32xf32>
    %115 = vector.extract_strided_slice %110 {offsets = [0, 96], sizes = [8, 32], strides = [1, 1]} : vector<8x128xf32> to vector<8x32xf32>
    %116 = arith.mulf %113, %90 : vector<8x32xf32>
    %117 = arith.mulf %112, %114 : vector<8x32xf32>
    %118 = arith.addf %116, %117 : vector<8x32xf32>
    %119 = math.tanh %118 : vector<8x32xf32>
    %120 = arith.mulf %115, %119 : vector<8x32xf32>
    %c8_i32_48 = arith.constant 8 : i32
    %121 = arith.muli %c0_i32, %c8_i32_48 : i32
    %122 = arith.addi %121, %c3_i32 : i32
    %c8_i32_49 = arith.constant 8 : i32
    %123 = arith.muli %122, %c8_i32_49 : i32
    %124 = tpu.assume_multiple %123, 8 : i32
    %125 = arith.index_cast %124 : i32 to index
    %c0_50 = arith.constant 0 : index
    %126 = vector.load %arg12[%125, %c0_50] : memref<64x32xf32, #tpu.memory_space<vmem>>, vector<8x32xf32>
    tpu.vector_store %arg12[%125, %c0_50], %120 {strides = array<i32>} : memref<64x32xf32, #tpu.memory_space<vmem>>, vector<8x32xf32>,
    %c4_i32 = arith.constant 4 : i32
    %c8_i32_51 = arith.constant 8 : i32
    %127 = arith.muli %c4_i32, %c8_i32_51 : i32
    %128 = tpu.assume_multiple %127, 8 : i32
    %129 = arith.index_cast %128 : i32 to index
    %c0_52 = arith.constant 0 : index
    %130 = vector.load %arg11[%129, %c0_52] : memref<64x128xf32, #tpu.memory_space<vmem>>, vector<8x128xf32>
    %c0_53 = arith.constant 0 : index
    %c0_54 = arith.constant 0 : index
    %131 = vector.load %arg5[%c0_53, %c0_54] : memref<32x128xf32, #tpu.memory_space<vmem>>, vector<32x128xf32>
    %cst_55 = arith.constant dense<0.000000e+00> : vector<8x128xf32>
    %132 = tpu.matmul %120, %131, %cst_55 {dimension_numbers = #tpu.dot_dimension_numbers<[1], [0], [0], [1], [0, 0, 1, 1], [], []>} : vector<8x32xf32>, vector<32x128xf32>, vector<8x128xf32> -> vector<8x128xf32>
    %133 = arith.addf %130, %132 : vector<8x128xf32>
    %134 = arith.negf %133 : vector<8x128xf32>
    %135 = math.exp %134 : vector<8x128xf32>
    %cst_56 = arith.constant 1.000000e+00 : f32
    %136 = vector.broadcast %cst_56 : f32 to vector<8x128xf32>
    %137 = arith.addf %136, %135 : vector<8x128xf32>
    %138 = arith.divf %136, %137 : vector<8x128xf32>
    %139 = math.tanh %133 : vector<8x128xf32>
    %140 = vector.extract_strided_slice %138 {offsets = [0, 0], sizes = [8, 32], strides = [1, 1]} : vector<8x128xf32> to vector<8x32xf32>
    %141 = vector.extract_strided_slice %138 {offsets = [0, 32], sizes = [8, 32], strides = [1, 1]} : vector<8x128xf32> to vector<8x32xf32>
    %142 = vector.extract_strided_slice %139 {offsets = [0, 64], sizes = [8, 32], strides = [1, 1]} : vector<8x128xf32> to vector<8x32xf32>
    %143 = vector.extract_strided_slice %138 {offsets = [0, 96], sizes = [8, 32], strides = [1, 1]} : vector<8x128xf32> to vector<8x32xf32>
    %144 = arith.mulf %141, %118 : vector<8x32xf32>
    %145 = arith.mulf %140, %142 : vector<8x32xf32>
    %146 = arith.addf %144, %145 : vector<8x32xf32>
    %147 = math.tanh %146 : vector<8x32xf32>
    %148 = arith.mulf %143, %147 : vector<8x32xf32>
    %c8_i32_57 = arith.constant 8 : i32
    %149 = arith.muli %c0_i32, %c8_i32_57 : i32
    %150 = arith.addi %149, %c4_i32 : i32
    %c8_i32_58 = arith.constant 8 : i32
    %151 = arith.muli %150, %c8_i32_58 : i32
    %152 = tpu.assume_multiple %151, 8 : i32
    %153 = arith.index_cast %152 : i32 to index
    %c0_59 = arith.constant 0 : index
    %154 = vector.load %arg12[%153, %c0_59] : memref<64x32xf32, #tpu.memory_space<vmem>>, vector<8x32xf32>
    tpu.vector_store %arg12[%153, %c0_59], %148 {strides = array<i32>} : memref<64x32xf32, #tpu.memory_space<vmem>>, vector<8x32xf32>,
    %c5_i32 = arith.constant 5 : i32
    %c8_i32_60 = arith.constant 8 : i32
    %155 = arith.muli %c5_i32, %c8_i32_60 : i32
    %156 = tpu.assume_multiple %155, 8 : i32
    %157 = arith.index_cast %156 : i32 to index
    %c0_61 = arith.constant 0 : index
    %158 = vector.load %arg11[%157, %c0_61] : memref<64x128xf32, #tpu.memory_space<vmem>>, vector<8x128xf32>
    %c0_62 = arith.constant 0 : index
    %c0_63 = arith.constant 0 : index
    %159 = vector.load %arg5[%c0_62, %c0_63] : memref<32x128xf32, #tpu.memory_space<vmem>>, vector<32x128xf32>
    %cst_64 = arith.constant dense<0.000000e+00> : vector<8x128xf32>
    %160 = tpu.matmul %148, %159, %cst_64 {dimension_numbers = #tpu.dot_dimension_numbers<[1], [0], [0], [1], [0, 0, 1, 1], [], []>} : vector<8x32xf32>, vector<32x128xf32>, vector<8x128xf32> -> vector<8x128xf32>
    %161 = arith.addf %158, %160 : vector<8x128xf32>
    %162 = arith.negf %161 : vector<8x128xf32>
    %163 = math.exp %162 : vector<8x128xf32>
    %cst_65 = arith.constant 1.000000e+00 : f32
    %164 = vector.broadcast %cst_65 : f32 to vector<8x128xf32>
    %165 = arith.addf %164, %163 : vector<8x128xf32>
    %166 = arith.divf %164, %165 : vector<8x128xf32>
    %167 = math.tanh %161 : vector<8x128xf32>
    %168 = vector.extract_strided_slice %166 {offsets = [0, 0], sizes = [8, 32], strides = [1, 1]} : vector<8x128xf32> to vector<8x32xf32>
    %169 = vector.extract_strided_slice %166 {offsets = [0, 32], sizes = [8, 32], strides = [1, 1]} : vector<8x128xf32> to vector<8x32xf32>
    %170 = vector.extract_strided_slice %167 {offsets = [0, 64], sizes = [8, 32], strides = [1, 1]} : vector<8x128xf32> to vector<8x32xf32>
    %171 = vector.extract_strided_slice %166 {offsets = [0, 96], sizes = [8, 32], strides = [1, 1]} : vector<8x128xf32> to vector<8x32xf32>
    %172 = arith.mulf %169, %146 : vector<8x32xf32>
    %173 = arith.mulf %168, %170 : vector<8x32xf32>
    %174 = arith.addf %172, %173 : vector<8x32xf32>
    %175 = math.tanh %174 : vector<8x32xf32>
    %176 = arith.mulf %171, %175 : vector<8x32xf32>
    %c8_i32_66 = arith.constant 8 : i32
    %177 = arith.muli %c0_i32, %c8_i32_66 : i32
    %178 = arith.addi %177, %c5_i32 : i32
    %c8_i32_67 = arith.constant 8 : i32
    %179 = arith.muli %178, %c8_i32_67 : i32
    %180 = tpu.assume_multiple %179, 8 : i32
    %181 = arith.index_cast %180 : i32 to index
    %c0_68 = arith.constant 0 : index
    %182 = vector.load %arg12[%181, %c0_68] : memref<64x32xf32, #tpu.memory_space<vmem>>, vector<8x32xf32>
    tpu.vector_store %arg12[%181, %c0_68], %176 {strides = array<i32>} : memref<64x32xf32, #tpu.memory_space<vmem>>, vector<8x32xf32>,
    %c6_i32 = arith.constant 6 : i32
    %c8_i32_69 = arith.constant 8 : i32
    %183 = arith.muli %c6_i32, %c8_i32_69 : i32
    %184 = tpu.assume_multiple %183, 8 : i32
    %185 = arith.index_cast %184 : i32 to index
    %c0_70 = arith.constant 0 : index
    %186 = vector.load %arg11[%185, %c0_70] : memref<64x128xf32, #tpu.memory_space<vmem>>, vector<8x128xf32>
    %c0_71 = arith.constant 0 : index
    %c0_72 = arith.constant 0 : index
    %187 = vector.load %arg5[%c0_71, %c0_72] : memref<32x128xf32, #tpu.memory_space<vmem>>, vector<32x128xf32>
    %cst_73 = arith.constant dense<0.000000e+00> : vector<8x128xf32>
    %188 = tpu.matmul %176, %187, %cst_73 {dimension_numbers = #tpu.dot_dimension_numbers<[1], [0], [0], [1], [0, 0, 1, 1], [], []>} : vector<8x32xf32>, vector<32x128xf32>, vector<8x128xf32> -> vector<8x128xf32>
    %189 = arith.addf %186, %188 : vector<8x128xf32>
    %190 = arith.negf %189 : vector<8x128xf32>
    %191 = math.exp %190 : vector<8x128xf32>
    %cst_74 = arith.constant 1.000000e+00 : f32
    %192 = vector.broadcast %cst_74 : f32 to vector<8x128xf32>
    %193 = arith.addf %192, %191 : vector<8x128xf32>
    %194 = arith.divf %192, %193 : vector<8x128xf32>
    %195 = math.tanh %189 : vector<8x128xf32>
    %196 = vector.extract_strided_slice %194 {offsets = [0, 0], sizes = [8, 32], strides = [1, 1]} : vector<8x128xf32> to vector<8x32xf32>
    %197 = vector.extract_strided_slice %194 {offsets = [0, 32], sizes = [8, 32], strides = [1, 1]} : vector<8x128xf32> to vector<8x32xf32>
    %198 = vector.extract_strided_slice %195 {offsets = [0, 64], sizes = [8, 32], strides = [1, 1]} : vector<8x128xf32> to vector<8x32xf32>
    %199 = vector.extract_strided_slice %194 {offsets = [0, 96], sizes = [8, 32], strides = [1, 1]} : vector<8x128xf32> to vector<8x32xf32>
    %200 = arith.mulf %197, %174 : vector<8x32xf32>
    %201 = arith.mulf %196, %198 : vector<8x32xf32>
    %202 = arith.addf %200, %201 : vector<8x32xf32>
    %203 = math.tanh %202 : vector<8x32xf32>
    %204 = arith.mulf %199, %203 : vector<8x32xf32>
    %c8_i32_75 = arith.constant 8 : i32
    %205 = arith.muli %c0_i32, %c8_i32_75 : i32
    %206 = arith.addi %205, %c6_i32 : i32
    %c8_i32_76 = arith.constant 8 : i32
    %207 = arith.muli %206, %c8_i32_76 : i32
    %208 = tpu.assume_multiple %207, 8 : i32
    %209 = arith.index_cast %208 : i32 to index
    %c0_77 = arith.constant 0 : index
    %210 = vector.load %arg12[%209, %c0_77] : memref<64x32xf32, #tpu.memory_space<vmem>>, vector<8x32xf32>
    tpu.vector_store %arg12[%209, %c0_77], %204 {strides = array<i32>} : memref<64x32xf32, #tpu.memory_space<vmem>>, vector<8x32xf32>,
    %c7_i32 = arith.constant 7 : i32
    %c8_i32_78 = arith.constant 8 : i32
    %211 = arith.muli %c7_i32, %c8_i32_78 : i32
    %212 = tpu.assume_multiple %211, 8 : i32
    %213 = arith.index_cast %212 : i32 to index
    %c0_79 = arith.constant 0 : index
    %214 = vector.load %arg11[%213, %c0_79] : memref<64x128xf32, #tpu.memory_space<vmem>>, vector<8x128xf32>
    %c0_80 = arith.constant 0 : index
    %c0_81 = arith.constant 0 : index
    %215 = vector.load %arg5[%c0_80, %c0_81] : memref<32x128xf32, #tpu.memory_space<vmem>>, vector<32x128xf32>
    %cst_82 = arith.constant dense<0.000000e+00> : vector<8x128xf32>
    %216 = tpu.matmul %204, %215, %cst_82 {dimension_numbers = #tpu.dot_dimension_numbers<[1], [0], [0], [1], [0, 0, 1, 1], [], []>} : vector<8x32xf32>, vector<32x128xf32>, vector<8x128xf32> -> vector<8x128xf32>
    %217 = arith.addf %214, %216 : vector<8x128xf32>
    %218 = arith.negf %217 : vector<8x128xf32>
    %219 = math.exp %218 : vector<8x128xf32>
    %cst_83 = arith.constant 1.000000e+00 : f32
    %220 = vector.broadcast %cst_83 : f32 to vector<8x128xf32>
    %221 = arith.addf %220, %219 : vector<8x128xf32>
    %222 = arith.divf %220, %221 : vector<8x128xf32>
    %223 = math.tanh %217 : vector<8x128xf32>
    %224 = vector.extract_strided_slice %222 {offsets = [0, 0], sizes = [8, 32], strides = [1, 1]} : vector<8x128xf32> to vector<8x32xf32>
    %225 = vector.extract_strided_slice %222 {offsets = [0, 32], sizes = [8, 32], strides = [1, 1]} : vector<8x128xf32> to vector<8x32xf32>
    %226 = vector.extract_strided_slice %223 {offsets = [0, 64], sizes = [8, 32], strides = [1, 1]} : vector<8x128xf32> to vector<8x32xf32>
    %227 = vector.extract_strided_slice %222 {offsets = [0, 96], sizes = [8, 32], strides = [1, 1]} : vector<8x128xf32> to vector<8x32xf32>
    %228 = arith.mulf %225, %202 : vector<8x32xf32>
    %229 = arith.mulf %224, %226 : vector<8x32xf32>
    %230 = arith.addf %228, %229 : vector<8x32xf32>
    %231 = math.tanh %230 : vector<8x32xf32>
    %232 = arith.mulf %227, %231 : vector<8x32xf32>
    %c8_i32_84 = arith.constant 8 : i32
    %233 = arith.muli %c0_i32, %c8_i32_84 : i32
    %234 = arith.addi %233, %c7_i32 : i32
    %c8_i32_85 = arith.constant 8 : i32
    %235 = arith.muli %234, %c8_i32_85 : i32
    %236 = tpu.assume_multiple %235, 8 : i32
    %237 = arith.index_cast %236 : i32 to index
    %c0_86 = arith.constant 0 : index
    %238 = vector.load %arg12[%237, %c0_86] : memref<64x32xf32, #tpu.memory_space<vmem>>, vector<8x32xf32>
    tpu.vector_store %arg12[%237, %c0_86], %232 {strides = array<i32>} : memref<64x32xf32, #tpu.memory_space<vmem>>, vector<8x32xf32>,
    %c8_i32_87 = arith.constant 8 : i32
    %c1_i32_88 = arith.constant 1 : i32
    %c0_89 = arith.constant 0 : index
    %c1 = arith.constant 1 : index
    %c0_90 = arith.constant 0 : index
    %c0_91 = arith.constant 0 : index
    %239 = vector.load %arg2[%c0_89, %c1, %c0_90, %c0_91] : memref<1x2x8x32xf32, #tpu.memory_space<vmem>>, vector<1x1x8x32xf32>
    %240 = vector.shape_cast %239 : vector<1x1x8x32xf32> to vector<8x32xf32>
    %c0_92 = arith.constant 0 : index
    %c1_93 = arith.constant 1 : index
    %c0_94 = arith.constant 0 : index
    %c0_95 = arith.constant 0 : index
    %241 = vector.load %arg3[%c0_92, %c1_93, %c0_94, %c0_95] : memref<1x2x8x32xf32, #tpu.memory_space<vmem>>, vector<1x1x8x32xf32>
    %242 = vector.shape_cast %241 : vector<1x1x8x32xf32> to vector<8x32xf32>
    %c0_i32_96 = arith.constant 0 : i32
    %c64_i32_97 = arith.constant 64 : i32
    %243 = arith.muli %c0_i32_96, %c64_i32_97 : i32
    %244 = tpu.assume_multiple %243, 64 : i32
    %245 = arith.index_cast %244 : i32 to index
    %c0_98 = arith.constant 0 : index
    %246 = vector.load %arg12[%245, %c0_98] : memref<64x32xf32, #tpu.memory_space<vmem>>, vector<64x32xf32>
    %c0_99 = arith.constant 0 : index
    %c0_100 = arith.constant 0 : index
    %247 = vector.load %arg7[%c0_99, %c0_100] : memref<32x128xf32, #tpu.memory_space<vmem>>, vector<32x128xf32>
    %cst_101 = arith.constant dense<0.000000e+00> : vector<64x128xf32>
    %248 = tpu.matmul %246, %247, %cst_101 {dimension_numbers = #tpu.dot_dimension_numbers<[1], [0], [0], [1], [0, 0, 1, 1], [], []>} : vector<64x32xf32>, vector<32x128xf32>, vector<64x128xf32> -> vector<64x128xf32>
    %c0_102 = arith.constant 0 : index
    %c0_103 = arith.constant 0 : index
    %249 = vector.load %arg9[%c0_102, %c0_103] : memref<1x128xf32, #tpu.memory_space<vmem>>, vector<1x128xf32>
    %250 = vector.broadcast %249 : vector<1x128xf32> to vector<64x128xf32>
    %251 = arith.addf %248, %250 : vector<64x128xf32>
    %c0_104 = arith.constant 0 : index
    %c0_105 = arith.constant 0 : index
    %252 = vector.load %arg11[%c0_104, %c0_105] : memref<64x128xf32, #tpu.memory_space<vmem>>, vector<64x128xf32>
    tpu.vector_store %arg11[%c0_104, %c0_105], %251 {strides = array<i32>} : memref<64x128xf32, #tpu.memory_space<vmem>>, vector<64x128xf32>,
    %c0_i32_106 = arith.constant 0 : i32
    %c8_i32_107 = arith.constant 8 : i32
    %253 = arith.muli %c0_i32_106, %c8_i32_107 : i32
    %254 = tpu.assume_multiple %253, 8 : i32
    %255 = arith.index_cast %254 : i32 to index
    %c0_108 = arith.constant 0 : index
    %256 = vector.load %arg11[%255, %c0_108] : memref<64x128xf32, #tpu.memory_space<vmem>>, vector<8x128xf32>
    %c0_109 = arith.constant 0 : index
    %c0_110 = arith.constant 0 : index
    %257 = vector.load %arg8[%c0_109, %c0_110] : memref<32x128xf32, #tpu.memory_space<vmem>>, vector<32x128xf32>
    %cst_111 = arith.constant dense<0.000000e+00> : vector<8x128xf32>
    %258 = tpu.matmul %240, %257, %cst_111 {dimension_numbers = #tpu.dot_dimension_numbers<[1], [0], [0], [1], [0, 0, 1, 1], [], []>} : vector<8x32xf32>, vector<32x128xf32>, vector<8x128xf32> -> vector<8x128xf32>
    %259 = arith.addf %256, %258 : vector<8x128xf32>
    %260 = arith.negf %259 : vector<8x128xf32>
    %261 = math.exp %260 : vector<8x128xf32>
    %cst_112 = arith.constant 1.000000e+00 : f32
    %262 = vector.broadcast %cst_112 : f32 to vector<8x128xf32>
    %263 = arith.addf %262, %261 : vector<8x128xf32>
    %264 = arith.divf %262, %263 : vector<8x128xf32>
    %265 = math.tanh %259 : vector<8x128xf32>
    %266 = vector.extract_strided_slice %264 {offsets = [0, 0], sizes = [8, 32], strides = [1, 1]} : vector<8x128xf32> to vector<8x32xf32>
    %267 = vector.extract_strided_slice %264 {offsets = [0, 32], sizes = [8, 32], strides = [1, 1]} : vector<8x128xf32> to vector<8x32xf32>
    %268 = vector.extract_strided_slice %265 {offsets = [0, 64], sizes = [8, 32], strides = [1, 1]} : vector<8x128xf32> to vector<8x32xf32>
    %269 = vector.extract_strided_slice %264 {offsets = [0, 96], sizes = [8, 32], strides = [1, 1]} : vector<8x128xf32> to vector<8x32xf32>
    %270 = arith.mulf %267, %242 : vector<8x32xf32>
    %271 = arith.mulf %266, %268 : vector<8x32xf32>
    %272 = arith.addf %270, %271 : vector<8x32xf32>
    %273 = math.tanh %272 : vector<8x32xf32>
    %274 = arith.mulf %269, %273 : vector<8x32xf32>
    %c8_i32_113 = arith.constant 8 : i32
    %275 = arith.muli %c0_i32_96, %c8_i32_113 : i32
    %276 = arith.addi %275, %c0_i32_106 : i32
    %c7_i32_114 = arith.constant 7 : i32
    %277 = arith.subi %c7_i32_114, %276 : i32
    %c8_i32_115 = arith.constant 8 : i32
    %278 = arith.muli %277, %c8_i32_115 : i32
    %279 = tpu.assume_multiple %278, 8 : i32
    %c0_116 = arith.constant 0 : index
    %280 = arith.index_cast %279 : i32 to index
    %c0_117 = arith.constant 0 : index
    %281 = vector.load %arg10[%c0_116, %280, %c0_117] : memref<1x64x32xf32, #tpu.memory_space<vmem>>, vector<1x8x32xf32>
    %282 = vector.shape_cast %281 : vector<1x8x32xf32> to vector<8x32xf32>
    %283 = vector.shape_cast %274 : vector<8x32xf32> to vector<1x8x32xf32>
    tpu.vector_store %arg10[%c0_116, %280, %c0_117], %283 {strides = array<i32>} : memref<1x64x32xf32, #tpu.memory_space<vmem>>, vector<1x8x32xf32>,
    %c1_i32_118 = arith.constant 1 : i32
    %c8_i32_119 = arith.constant 8 : i32
    %284 = arith.muli %c1_i32_118, %c8_i32_119 : i32
    %285 = tpu.assume_multiple %284, 8 : i32
    %286 = arith.index_cast %285 : i32 to index
    %c0_120 = arith.constant 0 : index
    %287 = vector.load %arg11[%286, %c0_120] : memref<64x128xf32, #tpu.memory_space<vmem>>, vector<8x128xf32>
    %c0_121 = arith.constant 0 : index
    %c0_122 = arith.constant 0 : index
    %288 = vector.load %arg8[%c0_121, %c0_122] : memref<32x128xf32, #tpu.memory_space<vmem>>, vector<32x128xf32>
    %cst_123 = arith.constant dense<0.000000e+00> : vector<8x128xf32>
    %289 = tpu.matmul %274, %288, %cst_123 {dimension_numbers = #tpu.dot_dimension_numbers<[1], [0], [0], [1], [0, 0, 1, 1], [], []>} : vector<8x32xf32>, vector<32x128xf32>, vector<8x128xf32> -> vector<8x128xf32>
    %290 = arith.addf %287, %289 : vector<8x128xf32>
    %291 = arith.negf %290 : vector<8x128xf32>
    %292 = math.exp %291 : vector<8x128xf32>
    %cst_124 = arith.constant 1.000000e+00 : f32
    %293 = vector.broadcast %cst_124 : f32 to vector<8x128xf32>
    %294 = arith.addf %293, %292 : vector<8x128xf32>
    %295 = arith.divf %293, %294 : vector<8x128xf32>
    %296 = math.tanh %290 : vector<8x128xf32>
    %297 = vector.extract_strided_slice %295 {offsets = [0, 0], sizes = [8, 32], strides = [1, 1]} : vector<8x128xf32> to vector<8x32xf32>
    %298 = vector.extract_strided_slice %295 {offsets = [0, 32], sizes = [8, 32], strides = [1, 1]} : vector<8x128xf32> to vector<8x32xf32>
    %299 = vector.extract_strided_slice %296 {offsets = [0, 64], sizes = [8, 32], strides = [1, 1]} : vector<8x128xf32> to vector<8x32xf32>
    %300 = vector.extract_strided_slice %295 {offsets = [0, 96], sizes = [8, 32], strides = [1, 1]} : vector<8x128xf32> to vector<8x32xf32>
    %301 = arith.mulf %298, %272 : vector<8x32xf32>
    %302 = arith.mulf %297, %299 : vector<8x32xf32>
    %303 = arith.addf %301, %302 : vector<8x32xf32>
    %304 = math.tanh %303 : vector<8x32xf32>
    %305 = arith.mulf %300, %304 : vector<8x32xf32>
    %c8_i32_125 = arith.constant 8 : i32
    %306 = arith.muli %c0_i32_96, %c8_i32_125 : i32
    %307 = arith.addi %306, %c1_i32_118 : i32
    %c7_i32_126 = arith.constant 7 : i32
    %308 = arith.subi %c7_i32_126, %307 : i32
    %c8_i32_127 = arith.constant 8 : i32
    %309 = arith.muli %308, %c8_i32_127 : i32
    %310 = tpu.assume_multiple %309, 8 : i32
    %c0_128 = arith.constant 0 : index
    %311 = arith.index_cast %310 : i32 to index
    %c0_129 = arith.constant 0 : index
    %312 = vector.load %arg10[%c0_128, %311, %c0_129] : memref<1x64x32xf32, #tpu.memory_space<vmem>>, vector<1x8x32xf32>
    %313 = vector.shape_cast %312 : vector<1x8x32xf32> to vector<8x32xf32>
    %314 = vector.shape_cast %305 : vector<8x32xf32> to vector<1x8x32xf32>
    tpu.vector_store %arg10[%c0_128, %311, %c0_129], %314 {strides = array<i32>} : memref<1x64x32xf32, #tpu.memory_space<vmem>>, vector<1x8x32xf32>,
    %c2_i32_130 = arith.constant 2 : i32
    %c8_i32_131 = arith.constant 8 : i32
    %315 = arith.muli %c2_i32_130, %c8_i32_131 : i32
    %316 = tpu.assume_multiple %315, 8 : i32
    %317 = arith.index_cast %316 : i32 to index
    %c0_132 = arith.constant 0 : index
    %318 = vector.load %arg11[%317, %c0_132] : memref<64x128xf32, #tpu.memory_space<vmem>>, vector<8x128xf32>
    %c0_133 = arith.constant 0 : index
    %c0_134 = arith.constant 0 : index
    %319 = vector.load %arg8[%c0_133, %c0_134] : memref<32x128xf32, #tpu.memory_space<vmem>>, vector<32x128xf32>
    %cst_135 = arith.constant dense<0.000000e+00> : vector<8x128xf32>
    %320 = tpu.matmul %305, %319, %cst_135 {dimension_numbers = #tpu.dot_dimension_numbers<[1], [0], [0], [1], [0, 0, 1, 1], [], []>} : vector<8x32xf32>, vector<32x128xf32>, vector<8x128xf32> -> vector<8x128xf32>
    %321 = arith.addf %318, %320 : vector<8x128xf32>
    %322 = arith.negf %321 : vector<8x128xf32>
    %323 = math.exp %322 : vector<8x128xf32>
    %cst_136 = arith.constant 1.000000e+00 : f32
    %324 = vector.broadcast %cst_136 : f32 to vector<8x128xf32>
    %325 = arith.addf %324, %323 : vector<8x128xf32>
    %326 = arith.divf %324, %325 : vector<8x128xf32>
    %327 = math.tanh %321 : vector<8x128xf32>
    %328 = vector.extract_strided_slice %326 {offsets = [0, 0], sizes = [8, 32], strides = [1, 1]} : vector<8x128xf32> to vector<8x32xf32>
    %329 = vector.extract_strided_slice %326 {offsets = [0, 32], sizes = [8, 32], strides = [1, 1]} : vector<8x128xf32> to vector<8x32xf32>
    %330 = vector.extract_strided_slice %327 {offsets = [0, 64], sizes = [8, 32], strides = [1, 1]} : vector<8x128xf32> to vector<8x32xf32>
    %331 = vector.extract_strided_slice %326 {offsets = [0, 96], sizes = [8, 32], strides = [1, 1]} : vector<8x128xf32> to vector<8x32xf32>
    %332 = arith.mulf %329, %303 : vector<8x32xf32>
    %333 = arith.mulf %328, %330 : vector<8x32xf32>
    %334 = arith.addf %332, %333 : vector<8x32xf32>
    %335 = math.tanh %334 : vector<8x32xf32>
    %336 = arith.mulf %331, %335 : vector<8x32xf32>
    %c8_i32_137 = arith.constant 8 : i32
    %337 = arith.muli %c0_i32_96, %c8_i32_137 : i32
    %338 = arith.addi %337, %c2_i32_130 : i32
    %c7_i32_138 = arith.constant 7 : i32
    %339 = arith.subi %c7_i32_138, %338 : i32
    %c8_i32_139 = arith.constant 8 : i32
    %340 = arith.muli %339, %c8_i32_139 : i32
    %341 = tpu.assume_multiple %340, 8 : i32
    %c0_140 = arith.constant 0 : index
    %342 = arith.index_cast %341 : i32 to index
    %c0_141 = arith.constant 0 : index
    %343 = vector.load %arg10[%c0_140, %342, %c0_141] : memref<1x64x32xf32, #tpu.memory_space<vmem>>, vector<1x8x32xf32>
    %344 = vector.shape_cast %343 : vector<1x8x32xf32> to vector<8x32xf32>
    %345 = vector.shape_cast %336 : vector<8x32xf32> to vector<1x8x32xf32>
    tpu.vector_store %arg10[%c0_140, %342, %c0_141], %345 {strides = array<i32>} : memref<1x64x32xf32, #tpu.memory_space<vmem>>, vector<1x8x32xf32>,
    %c3_i32_142 = arith.constant 3 : i32
    %c8_i32_143 = arith.constant 8 : i32
    %346 = arith.muli %c3_i32_142, %c8_i32_143 : i32
    %347 = tpu.assume_multiple %346, 8 : i32
    %348 = arith.index_cast %347 : i32 to index
    %c0_144 = arith.constant 0 : index
    %349 = vector.load %arg11[%348, %c0_144] : memref<64x128xf32, #tpu.memory_space<vmem>>, vector<8x128xf32>
    %c0_145 = arith.constant 0 : index
    %c0_146 = arith.constant 0 : index
    %350 = vector.load %arg8[%c0_145, %c0_146] : memref<32x128xf32, #tpu.memory_space<vmem>>, vector<32x128xf32>
    %cst_147 = arith.constant dense<0.000000e+00> : vector<8x128xf32>
    %351 = tpu.matmul %336, %350, %cst_147 {dimension_numbers = #tpu.dot_dimension_numbers<[1], [0], [0], [1], [0, 0, 1, 1], [], []>} : vector<8x32xf32>, vector<32x128xf32>, vector<8x128xf32> -> vector<8x128xf32>
    %352 = arith.addf %349, %351 : vector<8x128xf32>
    %353 = arith.negf %352 : vector<8x128xf32>
    %354 = math.exp %353 : vector<8x128xf32>
    %cst_148 = arith.constant 1.000000e+00 : f32
    %355 = vector.broadcast %cst_148 : f32 to vector<8x128xf32>
    %356 = arith.addf %355, %354 : vector<8x128xf32>
    %357 = arith.divf %355, %356 : vector<8x128xf32>
    %358 = math.tanh %352 : vector<8x128xf32>
    %359 = vector.extract_strided_slice %357 {offsets = [0, 0], sizes = [8, 32], strides = [1, 1]} : vector<8x128xf32> to vector<8x32xf32>
    %360 = vector.extract_strided_slice %357 {offsets = [0, 32], sizes = [8, 32], strides = [1, 1]} : vector<8x128xf32> to vector<8x32xf32>
    %361 = vector.extract_strided_slice %358 {offsets = [0, 64], sizes = [8, 32], strides = [1, 1]} : vector<8x128xf32> to vector<8x32xf32>
    %362 = vector.extract_strided_slice %357 {offsets = [0, 96], sizes = [8, 32], strides = [1, 1]} : vector<8x128xf32> to vector<8x32xf32>
    %363 = arith.mulf %360, %334 : vector<8x32xf32>
    %364 = arith.mulf %359, %361 : vector<8x32xf32>
    %365 = arith.addf %363, %364 : vector<8x32xf32>
    %366 = math.tanh %365 : vector<8x32xf32>
    %367 = arith.mulf %362, %366 : vector<8x32xf32>
    %c8_i32_149 = arith.constant 8 : i32
    %368 = arith.muli %c0_i32_96, %c8_i32_149 : i32
    %369 = arith.addi %368, %c3_i32_142 : i32
    %c7_i32_150 = arith.constant 7 : i32
    %370 = arith.subi %c7_i32_150, %369 : i32
    %c8_i32_151 = arith.constant 8 : i32
    %371 = arith.muli %370, %c8_i32_151 : i32
    %372 = tpu.assume_multiple %371, 8 : i32
    %c0_152 = arith.constant 0 : index
    %373 = arith.index_cast %372 : i32 to index
    %c0_153 = arith.constant 0 : index
    %374 = vector.load %arg10[%c0_152, %373, %c0_153] : memref<1x64x32xf32, #tpu.memory_space<vmem>>, vector<1x8x32xf32>
    %375 = vector.shape_cast %374 : vector<1x8x32xf32> to vector<8x32xf32>
    %376 = vector.shape_cast %367 : vector<8x32xf32> to vector<1x8x32xf32>
    tpu.vector_store %arg10[%c0_152, %373, %c0_153], %376 {strides = array<i32>} : memref<1x64x32xf32, #tpu.memory_space<vmem>>, vector<1x8x32xf32>,
    %c4_i32_154 = arith.constant 4 : i32
    %c8_i32_155 = arith.constant 8 : i32
    %377 = arith.muli %c4_i32_154, %c8_i32_155 : i32
    %378 = tpu.assume_multiple %377, 8 : i32
    %379 = arith.index_cast %378 : i32 to index
    %c0_156 = arith.constant 0 : index
    %380 = vector.load %arg11[%379, %c0_156] : memref<64x128xf32, #tpu.memory_space<vmem>>, vector<8x128xf32>
    %c0_157 = arith.constant 0 : index
    %c0_158 = arith.constant 0 : index
    %381 = vector.load %arg8[%c0_157, %c0_158] : memref<32x128xf32, #tpu.memory_space<vmem>>, vector<32x128xf32>
    %cst_159 = arith.constant dense<0.000000e+00> : vector<8x128xf32>
    %382 = tpu.matmul %367, %381, %cst_159 {dimension_numbers = #tpu.dot_dimension_numbers<[1], [0], [0], [1], [0, 0, 1, 1], [], []>} : vector<8x32xf32>, vector<32x128xf32>, vector<8x128xf32> -> vector<8x128xf32>
    %383 = arith.addf %380, %382 : vector<8x128xf32>
    %384 = arith.negf %383 : vector<8x128xf32>
    %385 = math.exp %384 : vector<8x128xf32>
    %cst_160 = arith.constant 1.000000e+00 : f32
    %386 = vector.broadcast %cst_160 : f32 to vector<8x128xf32>
    %387 = arith.addf %386, %385 : vector<8x128xf32>
    %388 = arith.divf %386, %387 : vector<8x128xf32>
    %389 = math.tanh %383 : vector<8x128xf32>
    %390 = vector.extract_strided_slice %388 {offsets = [0, 0], sizes = [8, 32], strides = [1, 1]} : vector<8x128xf32> to vector<8x32xf32>
    %391 = vector.extract_strided_slice %388 {offsets = [0, 32], sizes = [8, 32], strides = [1, 1]} : vector<8x128xf32> to vector<8x32xf32>
    %392 = vector.extract_strided_slice %389 {offsets = [0, 64], sizes = [8, 32], strides = [1, 1]} : vector<8x128xf32> to vector<8x32xf32>
    %393 = vector.extract_strided_slice %388 {offsets = [0, 96], sizes = [8, 32], strides = [1, 1]} : vector<8x128xf32> to vector<8x32xf32>
    %394 = arith.mulf %391, %365 : vector<8x32xf32>
    %395 = arith.mulf %390, %392 : vector<8x32xf32>
    %396 = arith.addf %394, %395 : vector<8x32xf32>
    %397 = math.tanh %396 : vector<8x32xf32>
    %398 = arith.mulf %393, %397 : vector<8x32xf32>
    %c8_i32_161 = arith.constant 8 : i32
    %399 = arith.muli %c0_i32_96, %c8_i32_161 : i32
    %400 = arith.addi %399, %c4_i32_154 : i32
    %c7_i32_162 = arith.constant 7 : i32
    %401 = arith.subi %c7_i32_162, %400 : i32
    %c8_i32_163 = arith.constant 8 : i32
    %402 = arith.muli %401, %c8_i32_163 : i32
    %403 = tpu.assume_multiple %402, 8 : i32
    %c0_164 = arith.constant 0 : index
    %404 = arith.index_cast %403 : i32 to index
    %c0_165 = arith.constant 0 : index
    %405 = vector.load %arg10[%c0_164, %404, %c0_165] : memref<1x64x32xf32, #tpu.memory_space<vmem>>, vector<1x8x32xf32>
    %406 = vector.shape_cast %405 : vector<1x8x32xf32> to vector<8x32xf32>
    %407 = vector.shape_cast %398 : vector<8x32xf32> to vector<1x8x32xf32>
    tpu.vector_store %arg10[%c0_164, %404, %c0_165], %407 {strides = array<i32>} : memref<1x64x32xf32, #tpu.memory_space<vmem>>, vector<1x8x32xf32>,
    %c5_i32_166 = arith.constant 5 : i32
    %c8_i32_167 = arith.constant 8 : i32
    %408 = arith.muli %c5_i32_166, %c8_i32_167 : i32
    %409 = tpu.assume_multiple %408, 8 : i32
    %410 = arith.index_cast %409 : i32 to index
    %c0_168 = arith.constant 0 : index
    %411 = vector.load %arg11[%410, %c0_168] : memref<64x128xf32, #tpu.memory_space<vmem>>, vector<8x128xf32>
    %c0_169 = arith.constant 0 : index
    %c0_170 = arith.constant 0 : index
    %412 = vector.load %arg8[%c0_169, %c0_170] : memref<32x128xf32, #tpu.memory_space<vmem>>, vector<32x128xf32>
    %cst_171 = arith.constant dense<0.000000e+00> : vector<8x128xf32>
    %413 = tpu.matmul %398, %412, %cst_171 {dimension_numbers = #tpu.dot_dimension_numbers<[1], [0], [0], [1], [0, 0, 1, 1], [], []>} : vector<8x32xf32>, vector<32x128xf32>, vector<8x128xf32> -> vector<8x128xf32>
    %414 = arith.addf %411, %413 : vector<8x128xf32>
    %415 = arith.negf %414 : vector<8x128xf32>
    %416 = math.exp %415 : vector<8x128xf32>
    %cst_172 = arith.constant 1.000000e+00 : f32
    %417 = vector.broadcast %cst_172 : f32 to vector<8x128xf32>
    %418 = arith.addf %417, %416 : vector<8x128xf32>
    %419 = arith.divf %417, %418 : vector<8x128xf32>
    %420 = math.tanh %414 : vector<8x128xf32>
    %421 = vector.extract_strided_slice %419 {offsets = [0, 0], sizes = [8, 32], strides = [1, 1]} : vector<8x128xf32> to vector<8x32xf32>
    %422 = vector.extract_strided_slice %419 {offsets = [0, 32], sizes = [8, 32], strides = [1, 1]} : vector<8x128xf32> to vector<8x32xf32>
    %423 = vector.extract_strided_slice %420 {offsets = [0, 64], sizes = [8, 32], strides = [1, 1]} : vector<8x128xf32> to vector<8x32xf32>
    %424 = vector.extract_strided_slice %419 {offsets = [0, 96], sizes = [8, 32], strides = [1, 1]} : vector<8x128xf32> to vector<8x32xf32>
    %425 = arith.mulf %422, %396 : vector<8x32xf32>
    %426 = arith.mulf %421, %423 : vector<8x32xf32>
    %427 = arith.addf %425, %426 : vector<8x32xf32>
    %428 = math.tanh %427 : vector<8x32xf32>
    %429 = arith.mulf %424, %428 : vector<8x32xf32>
    %c8_i32_173 = arith.constant 8 : i32
    %430 = arith.muli %c0_i32_96, %c8_i32_173 : i32
    %431 = arith.addi %430, %c5_i32_166 : i32
    %c7_i32_174 = arith.constant 7 : i32
    %432 = arith.subi %c7_i32_174, %431 : i32
    %c8_i32_175 = arith.constant 8 : i32
    %433 = arith.muli %432, %c8_i32_175 : i32
    %434 = tpu.assume_multiple %433, 8 : i32
    %c0_176 = arith.constant 0 : index
    %435 = arith.index_cast %434 : i32 to index
    %c0_177 = arith.constant 0 : index
    %436 = vector.load %arg10[%c0_176, %435, %c0_177] : memref<1x64x32xf32, #tpu.memory_space<vmem>>, vector<1x8x32xf32>
    %437 = vector.shape_cast %436 : vector<1x8x32xf32> to vector<8x32xf32>
    %438 = vector.shape_cast %429 : vector<8x32xf32> to vector<1x8x32xf32>
    tpu.vector_store %arg10[%c0_176, %435, %c0_177], %438 {strides = array<i32>} : memref<1x64x32xf32, #tpu.memory_space<vmem>>, vector<1x8x32xf32>,
    %c6_i32_178 = arith.constant 6 : i32
    %c8_i32_179 = arith.constant 8 : i32
    %439 = arith.muli %c6_i32_178, %c8_i32_179 : i32
    %440 = tpu.assume_multiple %439, 8 : i32
    %441 = arith.index_cast %440 : i32 to index
    %c0_180 = arith.constant 0 : index
    %442 = vector.load %arg11[%441, %c0_180] : memref<64x128xf32, #tpu.memory_space<vmem>>, vector<8x128xf32>
    %c0_181 = arith.constant 0 : index
    %c0_182 = arith.constant 0 : index
    %443 = vector.load %arg8[%c0_181, %c0_182] : memref<32x128xf32, #tpu.memory_space<vmem>>, vector<32x128xf32>
    %cst_183 = arith.constant dense<0.000000e+00> : vector<8x128xf32>
    %444 = tpu.matmul %429, %443, %cst_183 {dimension_numbers = #tpu.dot_dimension_numbers<[1], [0], [0], [1], [0, 0, 1, 1], [], []>} : vector<8x32xf32>, vector<32x128xf32>, vector<8x128xf32> -> vector<8x128xf32>
    %445 = arith.addf %442, %444 : vector<8x128xf32>
    %446 = arith.negf %445 : vector<8x128xf32>
    %447 = math.exp %446 : vector<8x128xf32>
    %cst_184 = arith.constant 1.000000e+00 : f32
    %448 = vector.broadcast %cst_184 : f32 to vector<8x128xf32>
    %449 = arith.addf %448, %447 : vector<8x128xf32>
    %450 = arith.divf %448, %449 : vector<8x128xf32>
    %451 = math.tanh %445 : vector<8x128xf32>
    %452 = vector.extract_strided_slice %450 {offsets = [0, 0], sizes = [8, 32], strides = [1, 1]} : vector<8x128xf32> to vector<8x32xf32>
    %453 = vector.extract_strided_slice %450 {offsets = [0, 32], sizes = [8, 32], strides = [1, 1]} : vector<8x128xf32> to vector<8x32xf32>
    %454 = vector.extract_strided_slice %451 {offsets = [0, 64], sizes = [8, 32], strides = [1, 1]} : vector<8x128xf32> to vector<8x32xf32>
    %455 = vector.extract_strided_slice %450 {offsets = [0, 96], sizes = [8, 32], strides = [1, 1]} : vector<8x128xf32> to vector<8x32xf32>
    %456 = arith.mulf %453, %427 : vector<8x32xf32>
    %457 = arith.mulf %452, %454 : vector<8x32xf32>
    %458 = arith.addf %456, %457 : vector<8x32xf32>
    %459 = math.tanh %458 : vector<8x32xf32>
    %460 = arith.mulf %455, %459 : vector<8x32xf32>
    %c8_i32_185 = arith.constant 8 : i32
    %461 = arith.muli %c0_i32_96, %c8_i32_185 : i32
    %462 = arith.addi %461, %c6_i32_178 : i32
    %c7_i32_186 = arith.constant 7 : i32
    %463 = arith.subi %c7_i32_186, %462 : i32
    %c8_i32_187 = arith.constant 8 : i32
    %464 = arith.muli %463, %c8_i32_187 : i32
    %465 = tpu.assume_multiple %464, 8 : i32
    %c0_188 = arith.constant 0 : index
    %466 = arith.index_cast %465 : i32 to index
    %c0_189 = arith.constant 0 : index
    %467 = vector.load %arg10[%c0_188, %466, %c0_189] : memref<1x64x32xf32, #tpu.memory_space<vmem>>, vector<1x8x32xf32>
    %468 = vector.shape_cast %467 : vector<1x8x32xf32> to vector<8x32xf32>
    %469 = vector.shape_cast %460 : vector<8x32xf32> to vector<1x8x32xf32>
    tpu.vector_store %arg10[%c0_188, %466, %c0_189], %469 {strides = array<i32>} : memref<1x64x32xf32, #tpu.memory_space<vmem>>, vector<1x8x32xf32>,
    %c7_i32_190 = arith.constant 7 : i32
    %c8_i32_191 = arith.constant 8 : i32
    %470 = arith.muli %c7_i32_190, %c8_i32_191 : i32
    %471 = tpu.assume_multiple %470, 8 : i32
    %472 = arith.index_cast %471 : i32 to index
    %c0_192 = arith.constant 0 : index
    %473 = vector.load %arg11[%472, %c0_192] : memref<64x128xf32, #tpu.memory_space<vmem>>, vector<8x128xf32>
    %c0_193 = arith.constant 0 : index
    %c0_194 = arith.constant 0 : index
    %474 = vector.load %arg8[%c0_193, %c0_194] : memref<32x128xf32, #tpu.memory_space<vmem>>, vector<32x128xf32>
    %cst_195 = arith.constant dense<0.000000e+00> : vector<8x128xf32>
    %475 = tpu.matmul %460, %474, %cst_195 {dimension_numbers = #tpu.dot_dimension_numbers<[1], [0], [0], [1], [0, 0, 1, 1], [], []>} : vector<8x32xf32>, vector<32x128xf32>, vector<8x128xf32> -> vector<8x128xf32>
    %476 = arith.addf %473, %475 : vector<8x128xf32>
    %477 = arith.negf %476 : vector<8x128xf32>
    %478 = math.exp %477 : vector<8x128xf32>
    %cst_196 = arith.constant 1.000000e+00 : f32
    %479 = vector.broadcast %cst_196 : f32 to vector<8x128xf32>
    %480 = arith.addf %479, %478 : vector<8x128xf32>
    %481 = arith.divf %479, %480 : vector<8x128xf32>
    %482 = math.tanh %476 : vector<8x128xf32>
    %483 = vector.extract_strided_slice %481 {offsets = [0, 0], sizes = [8, 32], strides = [1, 1]} : vector<8x128xf32> to vector<8x32xf32>
    %484 = vector.extract_strided_slice %481 {offsets = [0, 32], sizes = [8, 32], strides = [1, 1]} : vector<8x128xf32> to vector<8x32xf32>
    %485 = vector.extract_strided_slice %482 {offsets = [0, 64], sizes = [8, 32], strides = [1, 1]} : vector<8x128xf32> to vector<8x32xf32>
    %486 = vector.extract_strided_slice %481 {offsets = [0, 96], sizes = [8, 32], strides = [1, 1]} : vector<8x128xf32> to vector<8x32xf32>
    %487 = arith.mulf %484, %458 : vector<8x32xf32>
    %488 = arith.mulf %483, %485 : vector<8x32xf32>
    %489 = arith.addf %487, %488 : vector<8x32xf32>
    %490 = math.tanh %489 : vector<8x32xf32>
    %491 = arith.mulf %486, %490 : vector<8x32xf32>
    %c8_i32_197 = arith.constant 8 : i32
    %492 = arith.muli %c0_i32_96, %c8_i32_197 : i32
    %493 = arith.addi %492, %c7_i32_190 : i32
    %c7_i32_198 = arith.constant 7 : i32
    %494 = arith.subi %c7_i32_198, %493 : i32
    %c8_i32_199 = arith.constant 8 : i32
    %495 = arith.muli %494, %c8_i32_199 : i32
    %496 = tpu.assume_multiple %495, 8 : i32
    %c0_200 = arith.constant 0 : index
    %497 = arith.index_cast %496 : i32 to index
    %c0_201 = arith.constant 0 : index
    %498 = vector.load %arg10[%c0_200, %497, %c0_201] : memref<1x64x32xf32, #tpu.memory_space<vmem>>, vector<1x8x32xf32>
    %499 = vector.shape_cast %498 : vector<1x8x32xf32> to vector<8x32xf32>
    %500 = vector.shape_cast %491 : vector<8x32xf32> to vector<1x8x32xf32>
    tpu.vector_store %arg10[%c0_200, %497, %c0_201], %500 {strides = array<i32>} : memref<1x64x32xf32, #tpu.memory_space<vmem>>, vector<1x8x32xf32>,
    %c8_i32_202 = arith.constant 8 : i32
    %c1_i32_203 = arith.constant 1 : i32
    return
  }
  func.func @transform_0(%arg0: i32) -> (i32, i32, i32) {
    %c0_i32 = arith.constant 0 : i32
    %c0_i32_0 = arith.constant 0 : i32
    %c0_i32_1 = arith.constant 0 : i32
    return %arg0, %c0_i32, %c0_i32_0 : i32, i32, i32
  }
  func.func @transform_1(%arg0: i32) -> (i32, i32, i32, i32) {
    %c0_i32 = arith.constant 0 : i32
    %c0_i32_0 = arith.constant 0 : i32
    %c0_i32_1 = arith.constant 0 : i32
    %c0_i32_2 = arith.constant 0 : i32
    return %arg0, %c0_i32, %c0_i32_0, %c0_i32_1 : i32, i32, i32, i32
  }
  func.func @transform_2(%arg0: i32) -> (i32, i32, i32, i32) {
    %c0_i32 = arith.constant 0 : i32
    %c0_i32_0 = arith.constant 0 : i32
    %c0_i32_1 = arith.constant 0 : i32
    %c0_i32_2 = arith.constant 0 : i32
    return %arg0, %c0_i32, %c0_i32_0, %c0_i32_1 : i32, i32, i32, i32
  }
  func.func @transform_3(%arg0: i32) -> (i32, i32) {
    %c0_i32 = arith.constant 0 : i32
    %c0_i32_0 = arith.constant 0 : i32
    %c0_i32_1 = arith.constant 0 : i32
    return %c0_i32, %c0_i32_0 : i32, i32
  }
  func.func @transform_4(%arg0: i32) -> (i32, i32) {
    %c0_i32 = arith.constant 0 : i32
    %c0_i32_0 = arith.constant 0 : i32
    %c0_i32_1 = arith.constant 0 : i32
    return %c0_i32, %c0_i32_0 : i32, i32
  }
  func.func @transform_5(%arg0: i32) -> (i32, i32) {
    %c0_i32 = arith.constant 0 : i32
    %c0_i32_0 = arith.constant 0 : i32
    %c0_i32_1 = arith.constant 0 : i32
    return %c0_i32, %c0_i32_0 : i32, i32
  }
  func.func @transform_6(%arg0: i32) -> (i32, i32) {
    %c0_i32 = arith.constant 0 : i32
    %c0_i32_0 = arith.constant 0 : i32
    %c0_i32_1 = arith.constant 0 : i32
    return %c0_i32, %c0_i32_0 : i32, i32
  }
  func.func @transform_7(%arg0: i32) -> (i32, i32) {
    %c0_i32 = arith.constant 0 : i32
    %c0_i32_0 = arith.constant 0 : i32
    %c0_i32_1 = arith.constant 0 : i32
    return %c0_i32, %c0_i32_0 : i32, i32
  }
  func.func @transform_8(%arg0: i32) -> (i32, i32) {
    %c0_i32 = arith.constant 0 : i32
    %c0_i32_0 = arith.constant 0 : i32
    %c0_i32_1 = arith.constant 0 : i32
    return %c0_i32, %c0_i32_0 : i32, i32
  }
  func.func @transform_9(%arg0: i32) -> (i32, i32, i32) {
    %c0_i32 = arith.constant 0 : i32
    %c0_i32_0 = arith.constant 0 : i32
    %c0_i32_1 = arith.constant 0 : i32
    return %arg0, %c0_i32, %c0_i32_0 : i32, i32, i32
  }
}

</mosaic_0001>

<llo_original>
// kernel: tpu_custom_call.1
$region0: #{tpu_custom_call.1}
  #allocation0 [shape = 'u32[]', space=smem, size = 0x4, offset = 0x4, fixed_abs, tag = 'smem constant byte address 0x4 - core index']
  #allocation1 [shape = 'u32[72,128]{1,0:T(1,128)}', space=vmem, size = 0x9000, scoped, tag = 'internal scratch']
  #allocation2 [shape = 'f32[64,128]{1,0:T(8,128)}', space=vmem, size = 0x8000, scoped, tag = 'scratch operand']
  #allocation3 [shape = 'f32[64,32]{1,0:T(8,128)}', space=vmem, size = 0x8000, scoped, tag = 'scratch operand']
  %s0 = inlined_call_operand.vmem [shape: f32[1,64,16], index: 0, kind: input, shape index: {}]
  %s1 = inlined_call_operand.vmem [shape: f32[1,2,8,32], index: 1, kind: input, shape index: {}]
  %s2 = inlined_call_operand.hbm [shape: f32[1,2,8,32], index: 2, kind: input, shape index: {}]
  %s3 = inlined_call_operand.hbm [shape: f32[16,128], index: 3, kind: input, shape index: {}]
  %s4 = inlined_call_operand.vmem [shape: f32[32,128], index: 4, kind: input, shape index: {}]
  %s5 = inlined_call_operand.vmem [shape: f32[1,128], index: 5, kind: input, shape index: {}]
  %s6 = inlined_call_operand.vmem [shape: f32[32,128], index: 6, kind: input, shape index: {}]
  %s7 = inlined_call_operand.hbm [shape: f32[32,128], index: 7, kind: input, shape index: {}]
  %s8 = inlined_call_operand.vmem [shape: f32[1,128], index: 8, kind: input, shape index: {}]
  %s9 = inlined_call_operand.vmem [shape: f32[1,64,32], index: 9, kind: output, shape index: {}]
  %s10 = sld [smem:[#allocation0]]
  $region58: #{tpu_custom_call.1} parent=0
    _
  %s12 = ssub.s32 1, %s10
  %s13 = scalar_select 0, %s12, %s10
  $region1: #{tpu_custom_call.1} parent=0
    #allocation4 [shape = 'u8[8192]{0}', space=vmem, size = 0x2000, scoped, tag = 'input window, operand 2, single buffered']
    #allocation5 [shape = 's32[1]{0}', space=sflag, size = 0x4, scoped, tag = 'scoped memory for tpu_custom_call.1']
    #allocation6 [shape = 'u8[8192]{0}', space=vmem, size = 0x2000, scoped, tag = 'input window, operand 3, single buffered']
    #allocation7 [shape = 's32[1]{0}', space=sflag, size = 0x4, scoped, tag = 'scoped memory for tpu_custom_call.1']
    #allocation8 [shape = 'u8[16384]{0}', space=vmem, size = 0x4000, scoped, tag = 'input window, operand 7, single buffered']
    %14 = vsyncpa [#allocation5], 0
    %15 = vsyncpa [#allocation7], 0
    // Predicated region
    $region2: #{tpu_custom_call.1} parent=1 // pred_check
      _
    $region3: #{tpu_custom_call.1} parent=1 // pred_check_branch
      %17 = sbr.rel (0) target = $region5
    $region4: #{tpu_custom_call.1} parent=1 // pred_region
      _
    $region5: #{tpu_custom_call.1} parent=1 // pred_fallthru
      _
    // Predicated region
    $region6: #{tpu_custom_call.1} parent=1 // pred_check
      _
    $region7: #{tpu_custom_call.1} parent=1 // pred_check_branch
      %19 = sbr.rel (0) target = $region9
    $region8: #{tpu_custom_call.1} parent=1 // pred_region
      _
    $region9: #{tpu_custom_call.1} parent=1 // pred_fallthru
      _
    // Predicated region
    $region10: #{tpu_custom_call.1} parent=1 // pred_check
      _
    $region11: #{tpu_custom_call.1} parent=1 // pred_check_branch
      %21 = sbr.rel (0) target = $region13
    $region12: #{tpu_custom_call.1} parent=1 // pred_region
      %23 = vsyncadd [#allocation5], 0
      %s24 = sshll.u32 %s2, 4
      %s25 = int_to_ptr.hbm [resolvable:$true] %s24
      %s26 = sshll.u32 [#allocation4], 4
      %s27 = int_to_ptr.vmem [resolvable:$true] %s26
      %32 = dma.hbm_to_vmem [thread:$0]  %s25, 256, %s27, [#allocation5], 128, 128, 8
    $region13: #{tpu_custom_call.1} parent=1 // pred_fallthru
      _
    // Predicated region
    $region14: #{tpu_custom_call.1} parent=1 // pred_check
      _
    $region15: #{tpu_custom_call.1} parent=1 // pred_check_branch
      %34 = sbr.rel (0) target = $region17
    $region16: #{tpu_custom_call.1} parent=1 // pred_region
      %36 = vsyncadd [#allocation7], 0
      %s37 = sshll.u32 %s3, 4
      %s38 = int_to_ptr.hbm [resolvable:$true] %s37
      %s39 = sshll.u32 [#allocation6], 4
      %s40 = int_to_ptr.vmem [resolvable:$true] %s39
      %45 = dma.hbm_to_vmem [thread:$0]  %s38, 256, %s40, [#allocation7], 128, 128, 8
    $region17: #{tpu_custom_call.1} parent=1 // pred_fallthru
      _
    // Predicated region
    $region18: #{tpu_custom_call.1} parent=1 // pred_check
      _
    $region19: #{tpu_custom_call.1} parent=1 // pred_check_branch
      %47 = sbr.rel (0) target = $region21
    $region20: #{tpu_custom_call.1} parent=1 // pred_region
      _
    $region21: #{tpu_custom_call.1} parent=1 // pred_fallthru
      _
    // Predicated region
    $region22: #{tpu_custom_call.1} parent=1 // pred_check
      _
    $region23: #{tpu_custom_call.1} parent=1 // pred_check_branch
      %49 = sbr.rel (0) target = $region25
    $region24: #{tpu_custom_call.1} parent=1 // pred_region
      _
    $region25: #{tpu_custom_call.1} parent=1 // pred_fallthru
      _
    // Predicated region
    $region26: #{tpu_custom_call.1} parent=1 // pred_check
      _
    $region27: #{tpu_custom_call.1} parent=1 // pred_check_branch
      %51 = sbr.rel (0) target = $region29
    $region28: #{tpu_custom_call.1} parent=1 // pred_region
      _
    $region29: #{tpu_custom_call.1} parent=1 // pred_fallthru
      _
    // Predicated region
    $region30: #{tpu_custom_call.1} parent=1 // pred_check
      _
    $region31: #{tpu_custom_call.1} parent=1 // pred_check_branch
      %53 = sbr.rel (0) target = $region33
    $region32: #{tpu_custom_call.1} parent=1 // pred_region
      %55 = vsyncadd [#allocation7], 0
      %s56 = sshll.u32 %s7, 4
      %s57 = int_to_ptr.hbm [resolvable:$true] %s56
      %s58 = sshll.u32 [#allocation8], 4
      %s59 = int_to_ptr.vmem [resolvable:$true] %s58
      %64 = dma.hbm_to_vmem [thread:$0]  %s57, 512, %s59, [#allocation7], 128, 128, 8
    $region33: #{tpu_custom_call.1} parent=1 // pred_fallthru
      _
    // Predicated region
    $region34: #{tpu_custom_call.1} parent=1 // pred_check
      _
    $region35: #{tpu_custom_call.1} parent=1 // pred_check_branch
      %66 = sbr.rel (0) target = $region37
    $region36: #{tpu_custom_call.1} parent=1 // pred_region
      _
    $region37: #{tpu_custom_call.1} parent=1 // pred_fallthru
      _
    // Predicated region
    $region38: #{tpu_custom_call.1} parent=1 // pred_check
      _
    $region39: #{tpu_custom_call.1} parent=1 // pred_check_branch
      %68 = sbr.rel (0) target = $region41
    $region40: #{tpu_custom_call.1} parent=1 // pred_region
      %70 = dma.done [#allocation5], 256
    $region41: #{tpu_custom_call.1} parent=1 // pred_fallthru
      _
    // Predicated region
    $region42: #{tpu_custom_call.1} parent=1 // pred_check
      _
    $region43: #{tpu_custom_call.1} parent=1 // pred_check_branch
      %72 = sbr.rel (0) target = $region45
    $region44: #{tpu_custom_call.1} parent=1 // pred_region
      %74 = dma.done [#allocation7], 256
    $region45: #{tpu_custom_call.1} parent=1 // pred_fallthru
      _
    // Predicated region
    $region46: #{tpu_custom_call.1} parent=1 // pred_check
      _
    $region47: #{tpu_custom_call.1} parent=1 // pred_check_branch
      %76 = sbr.rel (0) target = $region49
    $region48: #{tpu_custom_call.1} parent=1 // pred_region
      %78 = dma.done [#allocation7], 512
    $region49: #{tpu_custom_call.1} parent=1 // pred_fallthru
      _
    %v79 = vld [vmem:[%s1] sm:$0xff]
    %v80 = vld [vmem:[#allocation4] sm:$0xff]
    %v81 = vld [vmem:[%s0] sm:$0xff]
    %v82 = vld [vmem:[%s0 + $0x8] sm:$0xff]
    %v83 = vld [vmem:[%s0 + $0x10] sm:$0xff]
    %v84 = vld [vmem:[%s0 + $0x18] sm:$0xff]
    %v85 = vld [vmem:[%s0 + $0x20] sm:$0xff]
    %v86 = vld [vmem:[%s0 + $0x28] sm:$0xff]
    %v87 = vld [vmem:[%s0 + $0x30] sm:$0xff]
    %v88 = vld [vmem:[%s0 + $0x38] sm:$0xff]
    %v89 = vld [vmem:[#allocation6] sm:$0xff]
    %v90 = vld [vmem:[#allocation6 + $0x8] sm:$0xff]
    %v91 = vld [vmem:[%s5] sm:$0x1]
    %v93 = vperm.slane %v91, 0
    %vm95 = vcmask 130048
    %v97 = vsel %vm95, %v81, 0
    %v100 = vsel %vm95, %v82, 0
    %v103 = vsel %vm95, %v83, 0
    %v106 = vsel %vm95, %v84, 0
    %v109 = vsel %vm95, %v85, 0
    %v112 = vsel %vm95, %v86, 0
    %v115 = vsel %vm95, %v87, 0
    %v118 = vsel %vm95, %v88, 0
    %120 = vmatpush.msra.mxu0 0.0
    %121 = vmatpush.msra.mxu0 0.0
    %122 = vmatpush.msra.mxu0 0.0
    %123 = vmatpush.msra.mxu0 0.0
    %124 = vmatpush.msra.mxu0 0.0
    %125 = vmatpush.msra.mxu0 0.0
    %126 = vmatpush.msra.mxu0 0.0
    %127 = vmatpush.msra.mxu0 0.0
    %128 = vmatpush.msra.mxu0 0.0
    %129 = vmatpush.msra.mxu0 0.0
    %130 = vmatpush.msra.mxu0 0.0
    %131 = vmatpush.msra.mxu0 0.0
    %132 = vmatpush.msra.mxu0 0.0
    %133 = vmatpush.msra.mxu0 0.0
    %134 = vmatpush.msra.mxu0 %v90
    %135 = vmatpush.msra.mxu0 %v89
    %136 = vmatmul.f32.gmra.mxu0 %v97
    %v137 = vpop.f32.mrf.mxu0
    %v138 = vadd.f32 %v93, %v137
    %139 = vmatmul.f32.gmra.mxu0 %v100
    %v140 = vpop.f32.mrf.mxu0
    %v141 = vadd.f32 %v93, %v140
    %142 = vmatmul.f32.gmra.mxu0 %v103
    %v143 = vpop.f32.mrf.mxu0
    %v144 = vadd.f32 %v93, %v143
    %145 = vmatmul.f32.gmra.mxu0 %v106
    %v146 = vpop.f32.mrf.mxu0
    %v147 = vadd.f32 %v93, %v146
    %148 = vmatmul.f32.gmra.mxu0 %v109
    %v149 = vpop.f32.mrf.mxu0
    %v150 = vadd.f32 %v93, %v149
    %151 = vmatmul.f32.gmra.mxu0 %v112
    %v152 = vpop.f32.mrf.mxu0
    %v153 = vadd.f32 %v93, %v152
    %154 = vmatmul.f32.gmra.mxu0 %v115
    %v155 = vpop.f32.mrf.mxu0
    %v156 = vadd.f32 %v93, %v155
    %157 = vmatmul.f32.gmra.mxu0 %v118
    %v158 = vpop.f32.mrf.mxu0
    %v159 = vadd.f32 %v93, %v158
    %160 = vdwg.mxu0
    %161 = vst [vmem:[#allocation2] sm:$0xff] %v138
    %162 = vst [vmem:[#allocation2 + $0x8] sm:$0xff] %v141
    %163 = vst [vmem:[#allocation2 + $0x10] sm:$0xff] %v144
    %164 = vst [vmem:[#allocation2 + $0x18] sm:$0xff] %v147
    %165 = vst [vmem:[#allocation2 + $0x20] sm:$0xff] %v150
    %166 = vst [vmem:[#allocation2 + $0x28] sm:$0xff] %v153
    %167 = vst [vmem:[#allocation2 + $0x30] sm:$0xff] %v156
    %168 = vst [vmem:[#allocation2 + $0x38] sm:$0xff] %v159
    %v169 = vld [vmem:[#allocation2] sm:$0xff]
    %v170 = vld [vmem:[%s4] sm:$0xff]
    %v171 = vld [vmem:[%s4 + $0x8] sm:$0xff]
    %v172 = vld [vmem:[%s4 + $0x10] sm:$0xff]
    %v173 = vld [vmem:[%s4 + $0x18] sm:$0xff]
    %vm174 = vcmask 261120
    %v176 = vsel %vm174, %v79, 0
    %178 = vmatpush.msra.mxu0 0.0
    %179 = vmatpush.msra.mxu0 0.0
    %180 = vmatpush.msra.mxu0 0.0
    %181 = vmatpush.msra.mxu0 0.0
    %182 = vmatpush.msra.mxu0 0.0
    %183 = vmatpush.msra.mxu0 0.0
    %184 = vmatpush.msra.mxu0 0.0
    %185 = vmatpush.msra.mxu0 0.0
    %186 = vmatpush.msra.mxu0 0.0
    %187 = vmatpush.msra.mxu0 0.0
    %188 = vmatpush.msra.mxu0 0.0
    %189 = vmatpush.msra.mxu0 0.0
    %190 = vmatpush.msra.mxu0 %v173
    %191 = vmatpush.msra.mxu0 %v172
    %192 = vmatpush.msra.mxu0 %v171
    %193 = vmatpush.msra.mxu0 %v170
    %194 = vmatmul.f32.gmra.mxu0 %v176
    %v195 = vpop.f32.mrf.mxu0
    %v196 = vadd.f32 0.0, %v195
    %197 = vdwg.mxu0
    %v198 = vadd.f32 %v169, %v196
    %v199 = vxor.u32 %v198, 2147483648
    %v200 = vmul.f32 %v199, 1.442695
    %v201 = vpow.pop %v200
    %v202 = vadd.f32 %v201, 1.0
    %v203 = vrcp.pop %v202
    %v204 = vmul.f32 %v202, %v203
    %v205 = vsub.f32 1.0, %v204
    %v206 = vmul.f32 %v203, %v205
    %v207 = vadd.f32 %v203, %v206
    %vm208 = vweird.f32 %v202
    %vm209 = vweird.f32 %v203
    %vm210 = vmor %vm208, %vm209
    %v211 = vsel %vm210, %v203, %v207
    %v212 = vand.u32 2147483647, %v202
    %vm213 = vcmp.eq.f32.partialorder %v212, 8.507059e+37
    %v214 = vand.u32 %v202, 2147483648
    %v215 = vor.u32 1.1754944e-38, %v214
    %v216 = vsel %vm213, %v215, %v211
    %v217 = vmul.f32 1.0, %v216
    %v218 = vtanh.pop %v198
    %220 = vrot.lane.b32.xlu0 %v80, 32
    %v221 = vpop.permute.xlu0 %220
    %v223 = vmul.f32 %v217, %v221
    %225 = vrot.lane.b32.xlu0 %v218, 64
    %v226 = vpop.permute.xlu0 %225
    %v228 = vmul.f32 %v217, %v226
    %230 = vrot.lane.b32.xlu0 %v228, 32
    %v231 = vpop.permute.xlu0 %230
    %v233 = vadd.f32 %v223, %v231
    %v234 = vtanh.pop %v233
    %236 = vrot.lane.b32.xlu0 %v234, 64
    %v237 = vpop.permute.xlu0 %236
    %v239 = vmul.f32 %v217, %v237
    %241 = vrot.lane.b32.xlu0 %v239, 32
    %v242 = vpop.permute.xlu0 %241
    %244 = vst.msk [vmem:[#allocation3] sm:$0xff] %vm174, %v242
    %s245 = scalar_lea.vmem [#allocation2], 8
    %v246 = vld [vmem:[%s245] sm:$0xff]
    %v247 = vld [vmem:[%s4] sm:$0xff]
    %v248 = vld [vmem:[%s4 + $0x8] sm:$0xff]
    %v249 = vld [vmem:[%s4 + $0x10] sm:$0xff]
    %v250 = vld [vmem:[%s4 + $0x18] sm:$0xff]
    %v251 = vsel %vm174, %v242, 0
    %253 = vmatpush.msra.mxu0 0.0
    %254 = vmatpush.msra.mxu0 0.0
    %255 = vmatpush.msra.mxu0 0.0
    %256 = vmatpush.msra.mxu0 0.0
    %257 = vmatpush.msra.mxu0 0.0
    %258 = vmatpush.msra.mxu0 0.0
    %259 = vmatpush.msra.mxu0 0.0
    %260 = vmatpush.msra.mxu0 0.0
    %261 = vmatpush.msra.mxu0 0.0
    %262 = vmatpush.msra.mxu0 0.0
    %263 = vmatpush.msra.mxu0 0.0
    %264 = vmatpush.msra.mxu0 0.0
    %265 = vmatpush.msra.mxu0 %v250
    %266 = vmatpush.msra.mxu0 %v249
    %267 = vmatpush.msra.mxu0 %v248
    %268 = vmatpush.msra.mxu0 %v247
    %269 = vmatmul.f32.gmra.mxu0 %v251
    %v270 = vpop.f32.mrf.mxu0
    %v271 = vadd.f32 0.0, %v270
    %272 = vdwg.mxu0
    %v273 = vadd.f32 %v246, %v271
    %v274 = vxor.u32 %v273, 2147483648
    %v275 = vmul.f32 %v274, 1.442695
    %v276 = vpow.pop %v275
    %v277 = vadd.f32 %v276, 1.0
    %v278 = vrcp.pop %v277
    %v279 = vmul.f32 %v277, %v278
    %v280 = vsub.f32 1.0, %v279
    %v281 = vmul.f32 %v278, %v280
    %v282 = vadd.f32 %v278, %v281
    %vm283 = vweird.f32 %v277
    %vm284 = vweird.f32 %v278
    %vm285 = vmor %vm283, %vm284
    %v286 = vsel %vm285, %v278, %v282
    %v287 = vand.u32 2147483647, %v277
    %vm288 = vcmp.eq.f32.partialorder %v287, 8.507059e+37
    %v289 = vand.u32 %v277, 2147483648
    %v290 = vor.u32 1.1754944e-38, %v289
    %v291 = vsel %vm288, %v290, %v286
    %v292 = vmul.f32 1.0, %v291
    %v293 = vtanh.pop %v273
    %v294 = vmul.f32 %v292, %v233
    %296 = vrot.lane.b32.xlu0 %v293, 64
    %v297 = vpop.permute.xlu0 %296
    %v299 = vmul.f32 %v292, %v297
    %301 = vrot.lane.b32.xlu0 %v299, 32
    %v302 = vpop.permute.xlu0 %301
    %v304 = vadd.f32 %v294, %v302
    %v305 = vtanh.pop %v304
    %307 = vrot.lane.b32.xlu0 %v305, 64
    %v308 = vpop.permute.xlu0 %307
    %v310 = vmul.f32 %v292, %v308
    %312 = vrot.lane.b32.xlu0 %v310, 32
    %v313 = vpop.permute.xlu0 %312
    %s315 = scalar_lea.vmem [#allocation3], 8
    %316 = vst.msk [vmem:[%s315] sm:$0xff] %vm174, %v313
    %s317 = scalar_lea.vmem [#allocation2], 16
    %v318 = vld [vmem:[%s317] sm:$0xff]
    %v319 = vld [vmem:[%s4] sm:$0xff]
    %v320 = vld [vmem:[%s4 + $0x8] sm:$0xff]
    %v321 = vld [vmem:[%s4 + $0x10] sm:$0xff]
    %v322 = vld [vmem:[%s4 + $0x18] sm:$0xff]
    %v323 = vsel %vm174, %v313, 0
    %325 = vmatpush.msra.mxu0 0.0
    %326 = vmatpush.msra.mxu0 0.0
    %327 = vmatpush.msra.mxu0 0.0
    %328 = vmatpush.msra.mxu0 0.0
    %329 = vmatpush.msra.mxu0 0.0
    %330 = vmatpush.msra.mxu0 0.0
    %331 = vmatpush.msra.mxu0 0.0
    %332 = vmatpush.msra.mxu0 0.0
    %333 = vmatpush.msra.mxu0 0.0
    %334 = vmatpush.msra.mxu0 0.0
    %335 = vmatpush.msra.mxu0 0.0
    %336 = vmatpush.msra.mxu0 0.0
    %337 = vmatpush.msra.mxu0 %v322
    %338 = vmatpush.msra.mxu0 %v321
    %339 = vmatpush.msra.mxu0 %v320
    %340 = vmatpush.msra.mxu0 %v319
    %341 = vmatmul.f32.gmra.mxu0 %v323
    %v342 = vpop.f32.mrf.mxu0
    %v343 = vadd.f32 0.0, %v342
    %344 = vdwg.mxu0
    %v345 = vadd.f32 %v318, %v343
    %v346 = vxor.u32 %v345, 2147483648
    %v347 = vmul.f32 %v346, 1.442695
    %v348 = vpow.pop %v347
    %v349 = vadd.f32 %v348, 1.0
    %v350 = vrcp.pop %v349
    %v351 = vmul.f32 %v349, %v350
    %v352 = vsub.f32 1.0, %v351
    %v353 = vmul.f32 %v350, %v352
    %v354 = vadd.f32 %v350, %v353
    %vm355 = vweird.f32 %v349
    %vm356 = vweird.f32 %v350
    %vm357 = vmor %vm355, %vm356
    %v358 = vsel %vm357, %v350, %v354
    %v359 = vand.u32 2147483647, %v349
    %vm360 = vcmp.eq.f32.partialorder %v359, 8.507059e+37
    %v361 = vand.u32 %v349, 2147483648
    %v362 = vor.u32 1.1754944e-38, %v361
    %v363 = vsel %vm360, %v362, %v358
    %v364 = vmul.f32 1.0, %v363
    %v365 = vtanh.pop %v345
    %v366 = vmul.f32 %v364, %v304
    %368 = vrot.lane.b32.xlu0 %v365, 64
    %v369 = vpop.permute.xlu0 %368
    %v371 = vmul.f32 %v364, %v369
    %373 = vrot.lane.b32.xlu0 %v371, 32
    %v374 = vpop.permute.xlu0 %373
    %v376 = vadd.f32 %v366, %v374
    %v377 = vtanh.pop %v376
    %379 = vrot.lane.b32.xlu0 %v377, 64
    %v380 = vpop.permute.xlu0 %379
    %v382 = vmul.f32 %v364, %v380
    %384 = vrot.lane.b32.xlu0 %v382, 32
    %v385 = vpop.permute.xlu0 %384
    %s387 = scalar_lea.vmem [#allocation3], 16
    %388 = vst.msk [vmem:[%s387] sm:$0xff] %vm174, %v385
    %s389 = scalar_lea.vmem [#allocation2], 24
    %v390 = vld [vmem:[%s389] sm:$0xff]
    %v391 = vld [vmem:[%s4] sm:$0xff]
    %v392 = vld [vmem:[%s4 + $0x8] sm:$0xff]
    %v393 = vld [vmem:[%s4 + $0x10] sm:$0xff]
    %v394 = vld [vmem:[%s4 + $0x18] sm:$0xff]
    %v395 = vsel %vm174, %v385, 0
    %397 = vmatpush.msra.mxu0 0.0
    %398 = vmatpush.msra.mxu0 0.0
    %399 = vmatpush.msra.mxu0 0.0
    %400 = vmatpush.msra.mxu0 0.0
    %401 = vmatpush.msra.mxu0 0.0
    %402 = vmatpush.msra.mxu0 0.0
    %403 = vmatpush.msra.mxu0 0.0
    %404 = vmatpush.msra.mxu0 0.0
    %405 = vmatpush.msra.mxu0 0.0
    %406 = vmatpush.msra.mxu0 0.0
    %407 = vmatpush.msra.mxu0 0.0
    %408 = vmatpush.msra.mxu0 0.0
    %409 = vmatpush.msra.mxu0 %v394
    %410 = vmatpush.msra.mxu0 %v393
    %411 = vmatpush.msra.mxu0 %v392
    %412 = vmatpush.msra.mxu0 %v391
    %413 = vmatmul.f32.gmra.mxu0 %v395
    %v414 = vpop.f32.mrf.mxu0
    %v415 = vadd.f32 0.0, %v414
    %416 = vdwg.mxu0
    %v417 = vadd.f32 %v390, %v415
    %v418 = vxor.u32 %v417, 2147483648
    %v419 = vmul.f32 %v418, 1.442695
    %v420 = vpow.pop %v419
    %v421 = vadd.f32 %v420, 1.0
    %v422 = vrcp.pop %v421
    %v423 = vmul.f32 %v421, %v422
    %v424 = vsub.f32 1.0, %v423
    %v425 = vmul.f32 %v422, %v424
    %v426 = vadd.f32 %v422, %v425
    %vm427 = vweird.f32 %v421
    %vm428 = vweird.f32 %v422
    %vm429 = vmor %vm427, %vm428
    %v430 = vsel %vm429, %v422, %v426
    %v431 = vand.u32 2147483647, %v421
    %vm432 = vcmp.eq.f32.partialorder %v431, 8.507059e+37
    %v433 = vand.u32 %v421, 2147483648
    %v434 = vor.u32 1.1754944e-38, %v433
    %v435 = vsel %vm432, %v434, %v430
    %v436 = vmul.f32 1.0, %v435
    %v437 = vtanh.pop %v417
    %v438 = vmul.f32 %v436, %v376
    %440 = vrot.lane.b32.xlu0 %v437, 64
    %v441 = vpop.permute.xlu0 %440
    %v443 = vmul.f32 %v436, %v441
    %445 = vrot.lane.b32.xlu0 %v443, 32
    %v446 = vpop.permute.xlu0 %445
    %v448 = vadd.f32 %v438, %v446
    %v449 = vtanh.pop %v448
    %451 = vrot.lane.b32.xlu0 %v449, 64
    %v452 = vpop.permute.xlu0 %451
    %v454 = vmul.f32 %v436, %v452
    %456 = vrot.lane.b32.xlu0 %v454, 32
    %v457 = vpop.permute.xlu0 %456
    %s459 = scalar_lea.vmem [#allocation3], 24
    %460 = vst.msk [vmem:[%s459] sm:$0xff] %vm174, %v457
    %s461 = scalar_lea.vmem [#allocation2], 32
    %v462 = vld [vmem:[%s461] sm:$0xff]
    %v463 = vld [vmem:[%s4] sm:$0xff]
    %v464 = vld [vmem:[%s4 + $0x8] sm:$0xff]
    %v465 = vld [vmem:[%s4 + $0x10] sm:$0xff]
    %v466 = vld [vmem:[%s4 + $0x18] sm:$0xff]
    %v467 = vsel %vm174, %v457, 0
    %469 = vmatpush.msra.mxu0 0.0
    %470 = vmatpush.msra.mxu0 0.0
    %471 = vmatpush.msra.mxu0 0.0
    %472 = vmatpush.msra.mxu0 0.0
    %473 = vmatpush.msra.mxu0 0.0
    %474 = vmatpush.msra.mxu0 0.0
    %475 = vmatpush.msra.mxu0 0.0
    %476 = vmatpush.msra.mxu0 0.0
    %477 = vmatpush.msra.mxu0 0.0
    %478 = vmatpush.msra.mxu0 0.0
    %479 = vmatpush.msra.mxu0 0.0
    %480 = vmatpush.msra.mxu0 0.0
    %481 = vmatpush.msra.mxu0 %v466
    %482 = vmatpush.msra.mxu0 %v465
    %483 = vmatpush.msra.mxu0 %v464
    %484 = vmatpush.msra.mxu0 %v463
    %485 = vmatmul.f32.gmra.mxu0 %v467
    %v486 = vpop.f32.mrf.mxu0
    %v487 = vadd.f32 0.0, %v486
    %488 = vdwg.mxu0
    %v489 = vadd.f32 %v462, %v487
    %v490 = vxor.u32 %v489, 2147483648
    %v491 = vmul.f32 %v490, 1.442695
    %v492 = vpow.pop %v491
    %v493 = vadd.f32 %v492, 1.0
    %v494 = vrcp.pop %v493
    %v495 = vmul.f32 %v493, %v494
    %v496 = vsub.f32 1.0, %v495
    %v497 = vmul.f32 %v494, %v496
    %v498 = vadd.f32 %v494, %v497
    %vm499 = vweird.f32 %v493
    %vm500 = vweird.f32 %v494
    %vm501 = vmor %vm499, %vm500
    %v502 = vsel %vm501, %v494, %v498
    %v503 = vand.u32 2147483647, %v493
    %vm504 = vcmp.eq.f32.partialorder %v503, 8.507059e+37
    %v505 = vand.u32 %v493, 2147483648
    %v506 = vor.u32 1.1754944e-38, %v505
    %v507 = vsel %vm504, %v506, %v502
    %v508 = vmul.f32 1.0, %v507
    %v509 = vtanh.pop %v489
    %v510 = vmul.f32 %v508, %v448
    %512 = vrot.lane.b32.xlu0 %v509, 64
    %v513 = vpop.permute.xlu0 %512
    %v515 = vmul.f32 %v508, %v513
    %517 = vrot.lane.b32.xlu0 %v515, 32
    %v518 = vpop.permute.xlu0 %517
    %v520 = vadd.f32 %v510, %v518
    %v521 = vtanh.pop %v520
    %523 = vrot.lane.b32.xlu0 %v521, 64
    %v524 = vpop.permute.xlu0 %523
    %v526 = vmul.f32 %v508, %v524
    %528 = vrot.lane.b32.xlu0 %v526, 32
    %v529 = vpop.permute.xlu0 %528
    %s531 = scalar_lea.vmem [#allocation3], 32
    %532 = vst.msk [vmem:[%s531] sm:$0xff] %vm174, %v529
    %s533 = scalar_lea.vmem [#allocation2], 40
    %v534 = vld [vmem:[%s533] sm:$0xff]
    %v535 = vld [vmem:[%s4] sm:$0xff]
    %v536 = vld [vmem:[%s4 + $0x8] sm:$0xff]
    %v537 = vld [vmem:[%s4 + $0x10] sm:$0xff]
    %v538 = vld [vmem:[%s4 + $0x18] sm:$0xff]
    %v539 = vsel %vm174, %v529, 0
    %541 = vmatpush.msra.mxu0 0.0
    %542 = vmatpush.msra.mxu0 0.0
    %543 = vmatpush.msra.mxu0 0.0
    %544 = vmatpush.msra.mxu0 0.0
    %545 = vmatpush.msra.mxu0 0.0
    %546 = vmatpush.msra.mxu0 0.0
    %547 = vmatpush.msra.mxu0 0.0
    %548 = vmatpush.msra.mxu0 0.0
    %549 = vmatpush.msra.mxu0 0.0
    %550 = vmatpush.msra.mxu0 0.0
    %551 = vmatpush.msra.mxu0 0.0
    %552 = vmatpush.msra.mxu0 0.0
    %553 = vmatpush.msra.mxu0 %v538
    %554 = vmatpush.msra.mxu0 %v537
    %555 = vmatpush.msra.mxu0 %v536
    %556 = vmatpush.msra.mxu0 %v535
    %557 = vmatmul.f32.gmra.mxu0 %v539
    %v558 = vpop.f32.mrf.mxu0
    %v559 = vadd.f32 0.0, %v558
    %560 = vdwg.mxu0
    %v561 = vadd.f32 %v534, %v559
    %v562 = vxor.u32 %v561, 2147483648
    %v563 = vmul.f32 %v562, 1.442695
    %v564 = vpow.pop %v563
    %v565 = vadd.f32 %v564, 1.0
    %v566 = vrcp.pop %v565
    %v567 = vmul.f32 %v565, %v566
    %v568 = vsub.f32 1.0, %v567
    %v569 = vmul.f32 %v566, %v568
    %v570 = vadd.f32 %v566, %v569
    %vm571 = vweird.f32 %v565
    %vm572 = vweird.f32 %v566
    %vm573 = vmor %vm571, %vm572
    %v574 = vsel %vm573, %v566, %v570
    %v575 = vand.u32 2147483647, %v565
    %vm576 = vcmp.eq.f32.partialorder %v575, 8.507059e+37
    %v577 = vand.u32 %v565, 2147483648
    %v578 = vor.u32 1.1754944e-38, %v577
    %v579 = vsel %vm576, %v578, %v574
    %v580 = vmul.f32 1.0, %v579
    %v581 = vtanh.pop %v561
    %v582 = vmul.f32 %v580, %v520
    %584 = vrot.lane.b32.xlu0 %v581, 64
    %v585 = vpop.permute.xlu0 %584
    %v587 = vmul.f32 %v580, %v585
    %589 = vrot.lane.b32.xlu0 %v587, 32
    %v590 = vpop.permute.xlu0 %589
    %v592 = vadd.f32 %v582, %v590
    %v593 = vtanh.pop %v592
    %595 = vrot.lane.b32.xlu0 %v593, 64
    %v596 = vpop.permute.xlu0 %595
    %v598 = vmul.f32 %v580, %v596
    %600 = vrot.lane.b32.xlu0 %v598, 32
    %v601 = vpop.permute.xlu0 %600
    %s603 = scalar_lea.vmem [#allocation3], 40
    %604 = vst.msk [vmem:[%s603] sm:$0xff] %vm174, %v601
    %s605 = scalar_lea.vmem [#allocation2], 48
    %v606 = vld [vmem:[%s605] sm:$0xff]
    %v607 = vld [vmem:[%s4] sm:$0xff]
    %v608 = vld [vmem:[%s4 + $0x8] sm:$0xff]
    %v609 = vld [vmem:[%s4 + $0x10] sm:$0xff]
    %v610 = vld [vmem:[%s4 + $0x18] sm:$0xff]
    %v611 = vsel %vm174, %v601, 0
    %613 = vmatpush.msra.mxu0 0.0
    %614 = vmatpush.msra.mxu0 0.0
    %615 = vmatpush.msra.mxu0 0.0
    %616 = vmatpush.msra.mxu0 0.0
    %617 = vmatpush.msra.mxu0 0.0
    %618 = vmatpush.msra.mxu0 0.0
    %619 = vmatpush.msra.mxu0 0.0
    %620 = vmatpush.msra.mxu0 0.0
    %621 = vmatpush.msra.mxu0 0.0
    %622 = vmatpush.msra.mxu0 0.0
    %623 = vmatpush.msra.mxu0 0.0
    %624 = vmatpush.msra.mxu0 0.0
    %625 = vmatpush.msra.mxu0 %v610
    %626 = vmatpush.msra.mxu0 %v609
    %627 = vmatpush.msra.mxu0 %v608
    %628 = vmatpush.msra.mxu0 %v607
    %629 = vmatmul.f32.gmra.mxu0 %v611
    %v630 = vpop.f32.mrf.mxu0
    %v631 = vadd.f32 0.0, %v630
    %632 = vdwg.mxu0
    %v633 = vadd.f32 %v606, %v631
    %v634 = vxor.u32 %v633, 2147483648
    %v635 = vmul.f32 %v634, 1.442695
    %v636 = vpow.pop %v635
    %v637 = vadd.f32 %v636, 1.0
    %v638 = vrcp.pop %v637
    %v639 = vmul.f32 %v637, %v638
    %v640 = vsub.f32 1.0, %v639
    %v641 = vmul.f32 %v638, %v640
    %v642 = vadd.f32 %v638, %v641
    %vm643 = vweird.f32 %v637
    %vm644 = vweird.f32 %v638
    %vm645 = vmor %vm643, %vm644
    %v646 = vsel %vm645, %v638, %v642
    %v647 = vand.u32 2147483647, %v637
    %vm648 = vcmp.eq.f32.partialorder %v647, 8.507059e+37
    %v649 = vand.u32 %v637, 2147483648
    %v650 = vor.u32 1.1754944e-38, %v649
    %v651 = vsel %vm648, %v650, %v646
    %v652 = vmul.f32 1.0, %v651
    %v653 = vtanh.pop %v633
    %v654 = vmul.f32 %v652, %v592
    %656 = vrot.lane.b32.xlu0 %v653, 64
    %v657 = vpop.permute.xlu0 %656
    %v659 = vmul.f32 %v652, %v657
    %661 = vrot.lane.b32.xlu0 %v659, 32
    %v662 = vpop.permute.xlu0 %661
    %v664 = vadd.f32 %v654, %v662
    %v665 = vtanh.pop %v664
    %667 = vrot.lane.b32.xlu0 %v665, 64
    %v668 = vpop.permute.xlu0 %667
    %v670 = vmul.f32 %v652, %v668
    %672 = vrot.lane.b32.xlu0 %v670, 32
    %v673 = vpop.permute.xlu0 %672
    %s675 = scalar_lea.vmem [#allocation3], 48
    %676 = vst.msk [vmem:[%s675] sm:$0xff] %vm174, %v673
    %s677 = scalar_lea.vmem [#allocation2], 56
    %v678 = vld [vmem:[%s677] sm:$0xff]
    %v679 = vld [vmem:[%s4] sm:$0xff]
    %v680 = vld [vmem:[%s4 + $0x8] sm:$0xff]
    %v681 = vld [vmem:[%s4 + $0x10] sm:$0xff]
    %v682 = vld [vmem:[%s4 + $0x18] sm:$0xff]
    %v683 = vsel %vm174, %v673, 0
    %685 = vmatpush.msra.mxu0 0.0
    %686 = vmatpush.msra.mxu0 0.0
    %687 = vmatpush.msra.mxu0 0.0
    %688 = vmatpush.msra.mxu0 0.0
    %689 = vmatpush.msra.mxu0 0.0
    %690 = vmatpush.msra.mxu0 0.0
    %691 = vmatpush.msra.mxu0 0.0
    %692 = vmatpush.msra.mxu0 0.0
    %693 = vmatpush.msra.mxu0 0.0
    %694 = vmatpush.msra.mxu0 0.0
    %695 = vmatpush.msra.mxu0 0.0
    %696 = vmatpush.msra.mxu0 0.0
    %697 = vmatpush.msra.mxu0 %v682
    %698 = vmatpush.msra.mxu0 %v681
    %699 = vmatpush.msra.mxu0 %v680
    %700 = vmatpush.msra.mxu0 %v679
    %701 = vmatmul.f32.gmra.mxu0 %v683
    %v702 = vpop.f32.mrf.mxu0
    %v703 = vadd.f32 0.0, %v702
    %704 = vdwg.mxu0
    %v705 = vadd.f32 %v678, %v703
    %v706 = vxor.u32 %v705, 2147483648
    %v707 = vmul.f32 %v706, 1.442695
    %v708 = vpow.pop %v707
    %v709 = vadd.f32 %v708, 1.0
    %v710 = vrcp.pop %v709
    %v711 = vmul.f32 %v709, %v710
    %v712 = vsub.f32 1.0, %v711
    %v713 = vmul.f32 %v710, %v712
    %v714 = vadd.f32 %v710, %v713
    %vm715 = vweird.f32 %v709
    %vm716 = vweird.f32 %v710
    %vm717 = vmor %vm715, %vm716
    %v718 = vsel %vm717, %v710, %v714
    %v719 = vand.u32 2147483647, %v709
    %vm720 = vcmp.eq.f32.partialorder %v719, 8.507059e+37
    %v721 = vand.u32 %v709, 2147483648
    %v722 = vor.u32 1.1754944e-38, %v721
    %v723 = vsel %vm720, %v722, %v718
    %v724 = vmul.f32 1.0, %v723
    %v725 = vtanh.pop %v705
    %v726 = vmul.f32 %v724, %v664
    %728 = vrot.lane.b32.xlu0 %v725, 64
    %v729 = vpop.permute.xlu0 %728
    %v731 = vmul.f32 %v724, %v729
    %733 = vrot.lane.b32.xlu0 %v731, 32
    %v734 = vpop.permute.xlu0 %733
    %v736 = vadd.f32 %v726, %v734
    %v737 = vtanh.pop %v736
    %739 = vrot.lane.b32.xlu0 %v737, 64
    %v740 = vpop.permute.xlu0 %739
    %v742 = vmul.f32 %v724, %v740
    %744 = vrot.lane.b32.xlu0 %v742, 32
    %v745 = vpop.permute.xlu0 %744
    %s747 = scalar_lea.vmem [#allocation3], 56
    %748 = vst.msk [vmem:[%s747] sm:$0xff] %vm174, %v745
    %s749 = scalar_lea.vmem %s1, 8
    %v750 = vld [vmem:[%s749] sm:$0xff]
    %s751 = scalar_lea.vmem [#allocation4], 8
    %v752 = vld [vmem:[%s751] sm:$0xff]
    %v753 = vld [vmem:[#allocation3] sm:$0xff]
    %v754 = vld [vmem:[#allocation3 + $0x8] sm:$0xff]
    %v755 = vld [vmem:[#allocation3 + $0x10] sm:$0xff]
    %v756 = vld [vmem:[#allocation3 + $0x18] sm:$0xff]
    %v757 = vld [vmem:[#allocation3 + $0x20] sm:$0xff]
    %v758 = vld [vmem:[#allocation3 + $0x28] sm:$0xff]
    %v759 = vld [vmem:[#allocation3 + $0x30] sm:$0xff]
    %v760 = vld [vmem:[#allocation3 + $0x38] sm:$0xff]
    %v761 = vld [vmem:[%s6] sm:$0xff]
    %v762 = vld [vmem:[%s6 + $0x8] sm:$0xff]
    %v763 = vld [vmem:[%s6 + $0x10] sm:$0xff]
    %v764 = vld [vmem:[%s6 + $0x18] sm:$0xff]
    %v765 = vld [vmem:[%s8] sm:$0x1]
    %v767 = vperm.slane %v765, 0
    %v770 = vsel %vm174, %v753, 0
    %v773 = vsel %vm174, %v754, 0
    %v776 = vsel %vm174, %v755, 0
    %v779 = vsel %vm174, %v756, 0
    %v782 = vsel %vm174, %v757, 0
    %v785 = vsel %vm174, %v758, 0
    %v788 = vsel %vm174, %v759, 0
    %v791 = vsel %vm174, %v760, 0
    %793 = vmatpush.msra.mxu0 0.0
    %794 = vmatpush.msra.mxu0 0.0
    %795 = vmatpush.msra.mxu0 0.0
    %796 = vmatpush.msra.mxu0 0.0
    %797 = vmatpush.msra.mxu0 0.0
    %798 = vmatpush.msra.mxu0 0.0
    %799 = vmatpush.msra.mxu0 0.0
    %800 = vmatpush.msra.mxu0 0.0
    %801 = vmatpush.msra.mxu0 0.0
    %802 = vmatpush.msra.mxu0 0.0
    %803 = vmatpush.msra.mxu0 0.0
    %804 = vmatpush.msra.mxu0 0.0
    %805 = vmatpush.msra.mxu0 %v764
    %806 = vmatpush.msra.mxu0 %v763
    %807 = vmatpush.msra.mxu0 %v762
    %808 = vmatpush.msra.mxu0 %v761
    %809 = vmatmul.f32.gmra.mxu0 %v770
    %v810 = vpop.f32.mrf.mxu0
    %v811 = vadd.f32 %v767, %v810
    %812 = vmatmul.f32.gmra.mxu0 %v773
    %v813 = vpop.f32.mrf.mxu0
    %v814 = vadd.f32 %v767, %v813
    %815 = vmatmul.f32.gmra.mxu0 %v776
    %v816 = vpop.f32.mrf.mxu0
    %v817 = vadd.f32 %v767, %v816
    %818 = vmatmul.f32.gmra.mxu0 %v779
    %v819 = vpop.f32.mrf.mxu0
    %v820 = vadd.f32 %v767, %v819
    %821 = vmatmul.f32.gmra.mxu0 %v782
    %v822 = vpop.f32.mrf.mxu0
    %v823 = vadd.f32 %v767, %v822
    %824 = vmatmul.f32.gmra.mxu0 %v785
    %v825 = vpop.f32.mrf.mxu0
    %v826 = vadd.f32 %v767, %v825
    %827 = vmatmul.f32.gmra.mxu0 %v788
    %v828 = vpop.f32.mrf.mxu0
    %v829 = vadd.f32 %v767, %v828
    %830 = vmatmul.f32.gmra.mxu0 %v791
    %v831 = vpop.f32.mrf.mxu0
    %v832 = vadd.f32 %v767, %v831
    %833 = vdwg.mxu0
    %834 = vst [vmem:[#allocation2] sm:$0xff] %v811
    %835 = vst [vmem:[#allocation2 + $0x8] sm:$0xff] %v814
    %836 = vst [vmem:[#allocation2 + $0x10] sm:$0xff] %v817
    %837 = vst [vmem:[#allocation2 + $0x18] sm:$0xff] %v820
    %838 = vst [vmem:[#allocation2 + $0x20] sm:$0xff] %v823
    %839 = vst [vmem:[#allocation2 + $0x28] sm:$0xff] %v826
    %840 = vst [vmem:[#allocation2 + $0x30] sm:$0xff] %v829
    %841 = vst [vmem:[#allocation2 + $0x38] sm:$0xff] %v832
    %v842 = vld [vmem:[#allocation2] sm:$0xff]
    %v843 = vld [vmem:[#allocation8] sm:$0xff]
    %v844 = vld [vmem:[#allocation8 + $0x8] sm:$0xff]
    %v845 = vld [vmem:[#allocation8 + $0x10] sm:$0xff]
    %v846 = vld [vmem:[#allocation8 + $0x18] sm:$0xff]
    %v848 = vsel %vm174, %v750, 0
    %850 = vmatpush.msra.mxu0 0.0
    %851 = vmatpush.msra.mxu0 0.0
    %852 = vmatpush.msra.mxu0 0.0
    %853 = vmatpush.msra.mxu0 0.0
    %854 = vmatpush.msra.mxu0 0.0
    %855 = vmatpush.msra.mxu0 0.0
    %856 = vmatpush.msra.mxu0 0.0
    %857 = vmatpush.msra.mxu0 0.0
    %858 = vmatpush.msra.mxu0 0.0
    %859 = vmatpush.msra.mxu0 0.0
    %860 = vmatpush.msra.mxu0 0.0
    %861 = vmatpush.msra.mxu0 0.0
    %862 = vmatpush.msra.mxu0 %v846
    %863 = vmatpush.msra.mxu0 %v845
    %864 = vmatpush.msra.mxu0 %v844
    %865 = vmatpush.msra.mxu0 %v843
    %866 = vmatmul.f32.gmra.mxu0 %v848
    %v867 = vpop.f32.mrf.mxu0
    %v868 = vadd.f32 0.0, %v867
    %869 = vdwg.mxu0
    %v870 = vadd.f32 %v842, %v868
    %v871 = vxor.u32 %v870, 2147483648
    %v872 = vmul.f32 %v871, 1.442695
    %v873 = vpow.pop %v872
    %v874 = vadd.f32 %v873, 1.0
    %v875 = vrcp.pop %v874
    %v876 = vmul.f32 %v874, %v875
    %v877 = vsub.f32 1.0, %v876
    %v878 = vmul.f32 %v875, %v877
    %v879 = vadd.f32 %v875, %v878
    %vm880 = vweird.f32 %v874
    %vm881 = vweird.f32 %v875
    %vm882 = vmor %vm880, %vm881
    %v883 = vsel %vm882, %v875, %v879
    %v884 = vand.u32 2147483647, %v874
    %vm885 = vcmp.eq.f32.partialorder %v884, 8.507059e+37
    %v886 = vand.u32 %v874, 2147483648
    %v887 = vor.u32 1.1754944e-38, %v886
    %v888 = vsel %vm885, %v887, %v883
    %v889 = vmul.f32 1.0, %v888
    %v890 = vtanh.pop %v870
    %892 = vrot.lane.b32.xlu0 %v752, 32
    %v893 = vpop.permute.xlu0 %892
    %v895 = vmul.f32 %v889, %v893
    %897 = vrot.lane.b32.xlu0 %v890, 64
    %v898 = vpop.permute.xlu0 %897
    %v900 = vmul.f32 %v889, %v898
    %902 = vrot.lane.b32.xlu0 %v900, 32
    %v903 = vpop.permute.xlu0 %902
    %v905 = vadd.f32 %v895, %v903
    %v906 = vtanh.pop %v905
    %908 = vrot.lane.b32.xlu0 %v906, 64
    %v909 = vpop.permute.xlu0 %908
    %v911 = vmul.f32 %v889, %v909
    %913 = vrot.lane.b32.xlu0 %v911, 32
    %v914 = vpop.permute.xlu0 %913
    %s916 = scalar_lea.vmem %s9, 56
    %917 = vst.msk [vmem:[%s916] sm:$0xff] %vm174, %v914
    %v918 = vld [vmem:[%s245] sm:$0xff]
    %v919 = vld [vmem:[#allocation8] sm:$0xff]
    %v920 = vld [vmem:[#allocation8 + $0x8] sm:$0xff]
    %v921 = vld [vmem:[#allocation8 + $0x10] sm:$0xff]
    %v922 = vld [vmem:[#allocation8 + $0x18] sm:$0xff]
    %v923 = vsel %vm174, %v914, 0
    %925 = vmatpush.msra.mxu0 0.0
    %926 = vmatpush.msra.mxu0 0.0
    %927 = vmatpush.msra.mxu0 0.0
    %928 = vmatpush.msra.mxu0 0.0
    %929 = vmatpush.msra.mxu0 0.0
    %930 = vmatpush.msra.mxu0 0.0
    %931 = vmatpush.msra.mxu0 0.0
    %932 = vmatpush.msra.mxu0 0.0
    %933 = vmatpush.msra.mxu0 0.0
    %934 = vmatpush.msra.mxu0 0.0
    %935 = vmatpush.msra.mxu0 0.0
    %936 = vmatpush.msra.mxu0 0.0
    %937 = vmatpush.msra.mxu0 %v922
    %938 = vmatpush.msra.mxu0 %v921
    %939 = vmatpush.msra.mxu0 %v920
    %940 = vmatpush.msra.mxu0 %v919
    %941 = vmatmul.f32.gmra.mxu0 %v923
    %v942 = vpop.f32.mrf.mxu0
    %v943 = vadd.f32 0.0, %v942
    %944 = vdwg.mxu0
    %v945 = vadd.f32 %v918, %v943
    %v946 = vxor.u32 %v945, 2147483648
    %v947 = vmul.f32 %v946, 1.442695
    %v948 = vpow.pop %v947
    %v949 = vadd.f32 %v948, 1.0
    %v950 = vrcp.pop %v949
    %v951 = vmul.f32 %v949, %v950
    %v952 = vsub.f32 1.0, %v951
    %v953 = vmul.f32 %v950, %v952
    %v954 = vadd.f32 %v950, %v953
    %vm955 = vweird.f32 %v949
    %vm956 = vweird.f32 %v950
    %vm957 = vmor %vm955, %vm956
    %v958 = vsel %vm957, %v950, %v954
    %v959 = vand.u32 2147483647, %v949
    %vm960 = vcmp.eq.f32.partialorder %v959, 8.507059e+37
    %v961 = vand.u32 %v949, 2147483648
    %v962 = vor.u32 1.1754944e-38, %v961
    %v963 = vsel %vm960, %v962, %v958
    %v964 = vmul.f32 1.0, %v963
    %v965 = vtanh.pop %v945
    %v966 = vmul.f32 %v964, %v905
    %968 = vrot.lane.b32.xlu0 %v965, 64
    %v969 = vpop.permute.xlu0 %968
    %v971 = vmul.f32 %v964, %v969
    %973 = vrot.lane.b32.xlu0 %v971, 32
    %v974 = vpop.permute.xlu0 %973
    %v976 = vadd.f32 %v966, %v974
    %v977 = vtanh.pop %v976
    %979 = vrot.lane.b32.xlu0 %v977, 64
    %v980 = vpop.permute.xlu0 %979
    %v982 = vmul.f32 %v964, %v980
    %984 = vrot.lane.b32.xlu0 %v982, 32
    %v985 = vpop.permute.xlu0 %984
    %s987 = scalar_lea.vmem %s9, 48
    %988 = vst.msk [vmem:[%s987] sm:$0xff] %vm174, %v985
    %v989 = vld [vmem:[%s317] sm:$0xff]
    %v990 = vld [vmem:[#allocation8] sm:$0xff]
    %v991 = vld [vmem:[#allocation8 + $0x8] sm:$0xff]
    %v992 = vld [vmem:[#allocation8 + $0x10] sm:$0xff]
    %v993 = vld [vmem:[#allocation8 + $0x18] sm:$0xff]
    %v994 = vsel %vm174, %v985, 0
    %996 = vmatpush.msra.mxu0 0.0
    %997 = vmatpush.msra.mxu0 0.0
    %998 = vmatpush.msra.mxu0 0.0
    %999 = vmatpush.msra.mxu0 0.0
    %1000 = vmatpush.msra.mxu0 0.0
    %1001 = vmatpush.msra.mxu0 0.0
    %1002 = vmatpush.msra.mxu0 0.0
    %1003 = vmatpush.msra.mxu0 0.0
    %1004 = vmatpush.msra.mxu0 0.0
    %1005 = vmatpush.msra.mxu0 0.0
    %1006 = vmatpush.msra.mxu0 0.0
    %1007 = vmatpush.msra.mxu0 0.0
    %1008 = vmatpush.msra.mxu0 %v993
    %1009 = vmatpush.msra.mxu0 %v992
    %1010 = vmatpush.msra.mxu0 %v991
    %1011 = vmatpush.msra.mxu0 %v990
    %1012 = vmatmul.f32.gmra.mxu0 %v994
    %v1013 = vpop.f32.mrf.mxu0
    %v1014 = vadd.f32 0.0, %v1013
    %1015 = vdwg.mxu0
    %v1016 = vadd.f32 %v989, %v1014
    %v1017 = vxor.u32 %v1016, 2147483648
    %v1018 = vmul.f32 %v1017, 1.442695
    %v1019 = vpow.pop %v1018
    %v1020 = vadd.f32 %v1019, 1.0
    %v1021 = vrcp.pop %v1020
    %v1022 = vmul.f32 %v1020, %v1021
    %v1023 = vsub.f32 1.0, %v1022
    %v1024 = vmul.f32 %v1021, %v1023
    %v1025 = vadd.f32 %v1021, %v1024
    %vm1026 = vweird.f32 %v1020
    %vm1027 = vweird.f32 %v1021
    %vm1028 = vmor %vm1026, %vm1027
    %v1029 = vsel %vm1028, %v1021, %v1025
    %v1030 = vand.u32 2147483647, %v1020
    %vm1031 = vcmp.eq.f32.partialorder %v1030, 8.507059e+37
    %v1032 = vand.u32 %v1020, 2147483648
    %v1033 = vor.u32 1.1754944e-38, %v1032
    %v1034 = vsel %vm1031, %v1033, %v1029
    %v1035 = vmul.f32 1.0, %v1034
    %v1036 = vtanh.pop %v1016
    %v1037 = vmul.f32 %v1035, %v976
    %1039 = vrot.lane.b32.xlu0 %v1036, 64
    %v1040 = vpop.permute.xlu0 %1039
    %v1042 = vmul.f32 %v1035, %v1040
    %1044 = vrot.lane.b32.xlu0 %v1042, 32
    %v1045 = vpop.permute.xlu0 %1044
    %v1047 = vadd.f32 %v1037, %v1045
    %v1048 = vtanh.pop %v1047
    %1050 = vrot.lane.b32.xlu0 %v1048, 64
    %v1051 = vpop.permute.xlu0 %1050
    %v1053 = vmul.f32 %v1035, %v1051
    %1055 = vrot.lane.b32.xlu0 %v1053, 32
    %v1056 = vpop.permute.xlu0 %1055
    %s1058 = scalar_lea.vmem %s9, 40
    %1059 = vst.msk [vmem:[%s1058] sm:$0xff] %vm174, %v1056
    %v1060 = vld [vmem:[%s389] sm:$0xff]
    %v1061 = vld [vmem:[#allocation8] sm:$0xff]
    %v1062 = vld [vmem:[#allocation8 + $0x8] sm:$0xff]
    %v1063 = vld [vmem:[#allocation8 + $0x10] sm:$0xff]
    %v1064 = vld [vmem:[#allocation8 + $0x18] sm:$0xff]
    %v1065 = vsel %vm174, %v1056, 0
    %1067 = vmatpush.msra.mxu0 0.0
    %1068 = vmatpush.msra.mxu0 0.0
    %1069 = vmatpush.msra.mxu0 0.0
    %1070 = vmatpush.msra.mxu0 0.0
    %1071 = vmatpush.msra.mxu0 0.0
    %1072 = vmatpush.msra.mxu0 0.0
    %1073 = vmatpush.msra.mxu0 0.0
    %1074 = vmatpush.msra.mxu0 0.0
    %1075 = vmatpush.msra.mxu0 0.0
    %1076 = vmatpush.msra.mxu0 0.0
    %1077 = vmatpush.msra.mxu0 0.0
    %1078 = vmatpush.msra.mxu0 0.0
    %1079 = vmatpush.msra.mxu0 %v1064
    %1080 = vmatpush.msra.mxu0 %v1063
    %1081 = vmatpush.msra.mxu0 %v1062
    %1082 = vmatpush.msra.mxu0 %v1061
    %1083 = vmatmul.f32.gmra.mxu0 %v1065
    %v1084 = vpop.f32.mrf.mxu0
    %v1085 = vadd.f32 0.0, %v1084
    %1086 = vdwg.mxu0
    %v1087 = vadd.f32 %v1060, %v1085
    %v1088 = vxor.u32 %v1087, 2147483648
    %v1089 = vmul.f32 %v1088, 1.442695
    %v1090 = vpow.pop %v1089
    %v1091 = vadd.f32 %v1090, 1.0
    %v1092 = vrcp.pop %v1091
    %v1093 = vmul.f32 %v1091, %v1092
    %v1094 = vsub.f32 1.0, %v1093
    %v1095 = vmul.f32 %v1092, %v1094
    %v1096 = vadd.f32 %v1092, %v1095
    %vm1097 = vweird.f32 %v1091
    %vm1098 = vweird.f32 %v1092
    %vm1099 = vmor %vm1097, %vm1098
    %v1100 = vsel %vm1099, %v1092, %v1096
    %v1101 = vand.u32 2147483647, %v1091
    %vm1102 = vcmp.eq.f32.partialorder %v1101, 8.507059e+37
    %v1103 = vand.u32 %v1091, 2147483648
    %v1104 = vor.u32 1.1754944e-38, %v1103
    %v1105 = vsel %vm1102, %v1104, %v1100
    %v1106 = vmul.f32 1.0, %v1105
    %v1107 = vtanh.pop %v1087
    %v1108 = vmul.f32 %v1106, %v1047
    %1110 = vrot.lane.b32.xlu0 %v1107, 64
    %v1111 = vpop.permute.xlu0 %1110
    %v1113 = vmul.f32 %v1106, %v1111
    %1115 = vrot.lane.b32.xlu0 %v1113, 32
    %v1116 = vpop.permute.xlu0 %1115
    %v1118 = vadd.f32 %v1108, %v1116
    %v1119 = vtanh.pop %v1118
    %1121 = vrot.lane.b32.xlu0 %v1119, 64
    %v1122 = vpop.permute.xlu0 %1121
    %v1124 = vmul.f32 %v1106, %v1122
    %1126 = vrot.lane.b32.xlu0 %v1124, 32
    %v1127 = vpop.permute.xlu0 %1126
    %s1129 = scalar_lea.vmem %s9, 32
    %1130 = vst.msk [vmem:[%s1129] sm:$0xff] %vm174, %v1127
    %v1131 = vld [vmem:[%s461] sm:$0xff]
    %v1132 = vld [vmem:[#allocation8] sm:$0xff]
    %v1133 = vld [vmem:[#allocation8 + $0x8] sm:$0xff]
    %v1134 = vld [vmem:[#allocation8 + $0x10] sm:$0xff]
    %v1135 = vld [vmem:[#allocation8 + $0x18] sm:$0xff]
    %v1136 = vsel %vm174, %v1127, 0
    %1138 = vmatpush.msra.mxu0 0.0
    %1139 = vmatpush.msra.mxu0 0.0
    %1140 = vmatpush.msra.mxu0 0.0
    %1141 = vmatpush.msra.mxu0 0.0
    %1142 = vmatpush.msra.mxu0 0.0
    %1143 = vmatpush.msra.mxu0 0.0
    %1144 = vmatpush.msra.mxu0 0.0
    %1145 = vmatpush.msra.mxu0 0.0
    %1146 = vmatpush.msra.mxu0 0.0
    %1147 = vmatpush.msra.mxu0 0.0
    %1148 = vmatpush.msra.mxu0 0.0
    %1149 = vmatpush.msra.mxu0 0.0
    %1150 = vmatpush.msra.mxu0 %v1135
    %1151 = vmatpush.msra.mxu0 %v1134
    %1152 = vmatpush.msra.mxu0 %v1133
    %1153 = vmatpush.msra.mxu0 %v1132
    %1154 = vmatmul.f32.gmra.mxu0 %v1136
    %v1155 = vpop.f32.mrf.mxu0
    %v1156 = vadd.f32 0.0, %v1155
    %1157 = vdwg.mxu0
    %v1158 = vadd.f32 %v1131, %v1156
    %v1159 = vxor.u32 %v1158, 2147483648
    %v1160 = vmul.f32 %v1159, 1.442695
    %v1161 = vpow.pop %v1160
    %v1162 = vadd.f32 %v1161, 1.0
    %v1163 = vrcp.pop %v1162
    %v1164 = vmul.f32 %v1162, %v1163
    %v1165 = vsub.f32 1.0, %v1164
    %v1166 = vmul.f32 %v1163, %v1165
    %v1167 = vadd.f32 %v1163, %v1166
    %vm1168 = vweird.f32 %v1162
    %vm1169 = vweird.f32 %v1163
    %vm1170 = vmor %vm1168, %vm1169
    %v1171 = vsel %vm1170, %v1163, %v1167
    %v1172 = vand.u32 2147483647, %v1162
    %vm1173 = vcmp.eq.f32.partialorder %v1172, 8.507059e+37
    %v1174 = vand.u32 %v1162, 2147483648
    %v1175 = vor.u32 1.1754944e-38, %v1174
    %v1176 = vsel %vm1173, %v1175, %v1171
    %v1177 = vmul.f32 1.0, %v1176
    %v1178 = vtanh.pop %v1158
    %v1179 = vmul.f32 %v1177, %v1118
    %1181 = vrot.lane.b32.xlu0 %v1178, 64
    %v1182 = vpop.permute.xlu0 %1181
    %v1184 = vmul.f32 %v1177, %v1182
    %1186 = vrot.lane.b32.xlu0 %v1184, 32
    %v1187 = vpop.permute.xlu0 %1186
    %v1189 = vadd.f32 %v1179, %v1187
    %v1190 = vtanh.pop %v1189
    %1192 = vrot.lane.b32.xlu0 %v1190, 64
    %v1193 = vpop.permute.xlu0 %1192
    %v1195 = vmul.f32 %v1177, %v1193
    %1197 = vrot.lane.b32.xlu0 %v1195, 32
    %v1198 = vpop.permute.xlu0 %1197
    %s1200 = scalar_lea.vmem %s9, 24
    %1201 = vst.msk [vmem:[%s1200] sm:$0xff] %vm174, %v1198
    %v1202 = vld [vmem:[%s533] sm:$0xff]
    %v1203 = vld [vmem:[#allocation8] sm:$0xff]
    %v1204 = vld [vmem:[#allocation8 + $0x8] sm:$0xff]
    %v1205 = vld [vmem:[#allocation8 + $0x10] sm:$0xff]
    %v1206 = vld [vmem:[#allocation8 + $0x18] sm:$0xff]
    %v1207 = vsel %vm174, %v1198, 0
    %1209 = vmatpush.msra.mxu0 0.0
    %1210 = vmatpush.msra.mxu0 0.0
    %1211 = vmatpush.msra.mxu0 0.0
    %1212 = vmatpush.msra.mxu0 0.0
    %1213 = vmatpush.msra.mxu0 0.0
    %1214 = vmatpush.msra.mxu0 0.0
    %1215 = vmatpush.msra.mxu0 0.0
    %1216 = vmatpush.msra.mxu0 0.0
    %1217 = vmatpush.msra.mxu0 0.0
    %1218 = vmatpush.msra.mxu0 0.0
    %1219 = vmatpush.msra.mxu0 0.0
    %1220 = vmatpush.msra.mxu0 0.0
    %1221 = vmatpush.msra.mxu0 %v1206
    %1222 = vmatpush.msra.mxu0 %v1205
    %1223 = vmatpush.msra.mxu0 %v1204
    %1224 = vmatpush.msra.mxu0 %v1203
    %1225 = vmatmul.f32.gmra.mxu0 %v1207
    %v1226 = vpop.f32.mrf.mxu0
    %v1227 = vadd.f32 0.0, %v1226
    %1228 = vdwg.mxu0
    %v1229 = vadd.f32 %v1202, %v1227
    %v1230 = vxor.u32 %v1229, 2147483648
    %v1231 = vmul.f32 %v1230, 1.442695
    %v1232 = vpow.pop %v1231
    %v1233 = vadd.f32 %v1232, 1.0
    %v1234 = vrcp.pop %v1233
    %v1235 = vmul.f32 %v1233, %v1234
    %v1236 = vsub.f32 1.0, %v1235
    %v1237 = vmul.f32 %v1234, %v1236
    %v1238 = vadd.f32 %v1234, %v1237
    %vm1239 = vweird.f32 %v1233
    %vm1240 = vweird.f32 %v1234
    %vm1241 = vmor %vm1239, %vm1240
    %v1242 = vsel %vm1241, %v1234, %v1238
    %v1243 = vand.u32 2147483647, %v1233
    %vm1244 = vcmp.eq.f32.partialorder %v1243, 8.507059e+37
    %v1245 = vand.u32 %v1233, 2147483648
    %v1246 = vor.u32 1.1754944e-38, %v1245
    %v1247 = vsel %vm1244, %v1246, %v1242
    %v1248 = vmul.f32 1.0, %v1247
    %v1249 = vtanh.pop %v1229
    %v1250 = vmul.f32 %v1248, %v1189
    %1252 = vrot.lane.b32.xlu0 %v1249, 64
    %v1253 = vpop.permute.xlu0 %1252
    %v1255 = vmul.f32 %v1248, %v1253
    %1257 = vrot.lane.b32.xlu0 %v1255, 32
    %v1258 = vpop.permute.xlu0 %1257
    %v1260 = vadd.f32 %v1250, %v1258
    %v1261 = vtanh.pop %v1260
    %1263 = vrot.lane.b32.xlu0 %v1261, 64
    %v1264 = vpop.permute.xlu0 %1263
    %v1266 = vmul.f32 %v1248, %v1264
    %1268 = vrot.lane.b32.xlu0 %v1266, 32
    %v1269 = vpop.permute.xlu0 %1268
    %s1271 = scalar_lea.vmem %s9, 16
    %1272 = vst.msk [vmem:[%s1271] sm:$0xff] %vm174, %v1269
    %v1273 = vld [vmem:[%s605] sm:$0xff]
    %v1274 = vld [vmem:[#allocation8] sm:$0xff]
    %v1275 = vld [vmem:[#allocation8 + $0x8] sm:$0xff]
    %v1276 = vld [vmem:[#allocation8 + $0x10] sm:$0xff]
    %v1277 = vld [vmem:[#allocation8 + $0x18] sm:$0xff]
    %v1278 = vsel %vm174, %v1269, 0
    %1280 = vmatpush.msra.mxu0 0.0
    %1281 = vmatpush.msra.mxu0 0.0
    %1282 = vmatpush.msra.mxu0 0.0
    %1283 = vmatpush.msra.mxu0 0.0
    %1284 = vmatpush.msra.mxu0 0.0
    %1285 = vmatpush.msra.mxu0 0.0
    %1286 = vmatpush.msra.mxu0 0.0
    %1287 = vmatpush.msra.mxu0 0.0
    %1288 = vmatpush.msra.mxu0 0.0
    %1289 = vmatpush.msra.mxu0 0.0
    %1290 = vmatpush.msra.mxu0 0.0
    %1291 = vmatpush.msra.mxu0 0.0
    %1292 = vmatpush.msra.mxu0 %v1277
    %1293 = vmatpush.msra.mxu0 %v1276
    %1294 = vmatpush.msra.mxu0 %v1275
    %1295 = vmatpush.msra.mxu0 %v1274
    %1296 = vmatmul.f32.gmra.mxu0 %v1278
    %v1297 = vpop.f32.mrf.mxu0
    %v1298 = vadd.f32 0.0, %v1297
    %1299 = vdwg.mxu0
    %v1300 = vadd.f32 %v1273, %v1298
    %v1301 = vxor.u32 %v1300, 2147483648
    %v1302 = vmul.f32 %v1301, 1.442695
    %v1303 = vpow.pop %v1302
    %v1304 = vadd.f32 %v1303, 1.0
    %v1305 = vrcp.pop %v1304
    %v1306 = vmul.f32 %v1304, %v1305
    %v1307 = vsub.f32 1.0, %v1306
    %v1308 = vmul.f32 %v1305, %v1307
    %v1309 = vadd.f32 %v1305, %v1308
    %vm1310 = vweird.f32 %v1304
    %vm1311 = vweird.f32 %v1305
    %vm1312 = vmor %vm1310, %vm1311
    %v1313 = vsel %vm1312, %v1305, %v1309
    %v1314 = vand.u32 2147483647, %v1304
    %vm1315 = vcmp.eq.f32.partialorder %v1314, 8.507059e+37
    %v1316 = vand.u32 %v1304, 2147483648
    %v1317 = vor.u32 1.1754944e-38, %v1316
    %v1318 = vsel %vm1315, %v1317, %v1313
    %v1319 = vmul.f32 1.0, %v1318
    %v1320 = vtanh.pop %v1300
    %v1321 = vmul.f32 %v1319, %v1260
    %1323 = vrot.lane.b32.xlu0 %v1320, 64
    %v1324 = vpop.permute.xlu0 %1323
    %v1326 = vmul.f32 %v1319, %v1324
    %1328 = vrot.lane.b32.xlu0 %v1326, 32
    %v1329 = vpop.permute.xlu0 %1328
    %v1331 = vadd.f32 %v1321, %v1329
    %v1332 = vtanh.pop %v1331
    %1334 = vrot.lane.b32.xlu0 %v1332, 64
    %v1335 = vpop.permute.xlu0 %1334
    %v1337 = vmul.f32 %v1319, %v1335
    %1339 = vrot.lane.b32.xlu0 %v1337, 32
    %v1340 = vpop.permute.xlu0 %1339
    %s1342 = scalar_lea.vmem %s9, 8
    %1343 = vst.msk [vmem:[%s1342] sm:$0xff] %vm174, %v1340
    %v1344 = vld [vmem:[%s677] sm:$0xff]
    %v1345 = vld [vmem:[#allocation8] sm:$0xff]
    %v1346 = vld [vmem:[#allocation8 + $0x8] sm:$0xff]
    %v1347 = vld [vmem:[#allocation8 + $0x10] sm:$0xff]
    %v1348 = vld [vmem:[#allocation8 + $0x18] sm:$0xff]
    %v1349 = vsel %vm174, %v1340, 0
    %1351 = vmatpush.msra.mxu0 0.0
    %1352 = vmatpush.msra.mxu0 0.0
    %1353 = vmatpush.msra.mxu0 0.0
    %1354 = vmatpush.msra.mxu0 0.0
    %1355 = vmatpush.msra.mxu0 0.0
    %1356 = vmatpush.msra.mxu0 0.0
    %1357 = vmatpush.msra.mxu0 0.0
    %1358 = vmatpush.msra.mxu0 0.0
    %1359 = vmatpush.msra.mxu0 0.0
    %1360 = vmatpush.msra.mxu0 0.0
    %1361 = vmatpush.msra.mxu0 0.0
    %1362 = vmatpush.msra.mxu0 0.0
    %1363 = vmatpush.msra.mxu0 %v1348
    %1364 = vmatpush.msra.mxu0 %v1347
    %1365 = vmatpush.msra.mxu0 %v1346
    %1366 = vmatpush.msra.mxu0 %v1345
    %1367 = vmatmul.f32.gmra.mxu0 %v1349
    %v1368 = vpop.f32.mrf.mxu0
    %v1369 = vadd.f32 0.0, %v1368
    %1370 = vdwg.mxu0
    %v1371 = vadd.f32 %v1344, %v1369
    %v1372 = vxor.u32 %v1371, 2147483648
    %v1373 = vmul.f32 %v1372, 1.442695
    %v1374 = vpow.pop %v1373
    %v1375 = vadd.f32 %v1374, 1.0
    %v1376 = vrcp.pop %v1375
    %v1377 = vmul.f32 %v1375, %v1376
    %v1378 = vsub.f32 1.0, %v1377
    %v1379 = vmul.f32 %v1376, %v1378
    %v1380 = vadd.f32 %v1376, %v1379
    %vm1381 = vweird.f32 %v1375
    %vm1382 = vweird.f32 %v1376
    %vm1383 = vmor %vm1381, %vm1382
    %v1384 = vsel %vm1383, %v1376, %v1380
    %v1385 = vand.u32 2147483647, %v1375
    %vm1386 = vcmp.eq.f32.partialorder %v1385, 8.507059e+37
    %v1387 = vand.u32 %v1375, 2147483648
    %v1388 = vor.u32 1.1754944e-38, %v1387
    %v1389 = vsel %vm1386, %v1388, %v1384
    %v1390 = vmul.f32 1.0, %v1389
    %v1391 = vtanh.pop %v1371
    %v1392 = vmul.f32 %v1390, %v1331
    %1394 = vrot.lane.b32.xlu0 %v1391, 64
    %v1395 = vpop.permute.xlu0 %1394
    %v1397 = vmul.f32 %v1390, %v1395
    %1399 = vrot.lane.b32.xlu0 %v1397, 32
    %v1400 = vpop.permute.xlu0 %1399
    %v1402 = vadd.f32 %v1392, %v1400
    %v1403 = vtanh.pop %v1402
    %1405 = vrot.lane.b32.xlu0 %v1403, 64
    %v1406 = vpop.permute.xlu0 %1405
    %v1408 = vmul.f32 %v1390, %v1406
    %1410 = vrot.lane.b32.xlu0 %v1408, 32
    %v1411 = vpop.permute.xlu0 %1410
    %1413 = vst.msk [vmem:[%s9] sm:$0xff] %vm174, %v1411
    // Predicated region
    $region50: #{tpu_custom_call.1} parent=1 // pred_check
      _
    $region51: #{tpu_custom_call.1} parent=1 // pred_check_branch
      %1415 = sbr.rel (0) target = $region53
    $region52: #{tpu_custom_call.1} parent=1 // pred_region
      _
    $region53: #{tpu_custom_call.1} parent=1 // pred_fallthru
      _
    // Predicated region
    $region54: #{tpu_custom_call.1} parent=1 // pred_check
      _
    $region55: #{tpu_custom_call.1} parent=1 // pred_check_branch
      %1417 = sbr.rel (0) target = $region57
    $region56: #{tpu_custom_call.1} parent=1 // pred_region
      _
    $region57: #{tpu_custom_call.1} parent=1 // pred_fallthru
      _
    %1418 = vsyncpa [#allocation5], 1
    %1419 = vsyncpa [#allocation7], 1

</llo_original>
